<compile_context>
chip_gen: v6e
topology: v6e:2x2x1
jax: 0.10.0
libtpu: 0.0.40
codegen_flags: <defaults>
</compile_context>

<pallas_src>
import functools
import math

import jax
import jax.numpy as jnp
import numpy as np
from jax import lax
from jax.experimental import pallas as pl
from jax.experimental.pallas import tpu as pltpu

EPS = 1e-5


def _cond_crp_kernel(x_ref, g_ref, a_ref, b_ref, w_ref, m_ref, o_ref, *,
                     n_stages, H, W, b_tile, mxu_dtype):
    """One grid step = `b_tile` samples; channels on sublanes, batch*spatial on lanes.

    x_ref : (1, C, N)                  f32  N = b_tile*H*W, sample-major lane axis
    g/a/b : (1, n_stages*b_tile, C, 1) f32  norm params per (stage, sample)
    w_ref : (n_stages, C, 9*C)         mxu  fused conv3x3 weights, tap-major columns
    m_ref : (19, N)                    f32  rows 0-4 hmask(dw=-2..2), 5-9 vmask(dh=-2..2),
                                            10-18 conv tap masks (dh,dw in {-1,0,1})
    o_ref : (1, C, N)                  f32
    """
    C = x_ref.shape[1]
    N = x_ref.shape[2]
    F = H * W

    # Hoist the stage-invariant mask rows once; (1, N) each, broadcast in use.
    hm = {d: m_ref[2 + d:3 + d, :] for d in (-2, -1, 1, 2)}
    vm = {d: m_ref[7 + d:8 + d, :] for d in (-2, -1, 1, 2)}
    tap_m = [m_ref[10 + t:11 + t, :] for t in range(9)]

    def sh(v, delta):
        # value at flat lane position p + delta lands at p; wrap is masked by caller
        return pltpu.roll(v, shift=(-delta) % N, axis=1)

    x = jnp.maximum(x_ref[0], 0.0)                      # act(x)
    path = x
    inv_cm1 = 1.0 / max(C - 1, 1)

    for i in range(n_stages):
        # ---- ConditionalInstanceNorm2dPlus (per sample, scale/shift form) ----
        segs = []
        for b in range(b_tile):
            seg = path if b_tile == 1 else path[:, b * F:(b + 1) * F]
            gamma = g_ref[0, i * b_tile + b]            # (C, 1)
            alpha = a_ref[0, i * b_tile + b]
            beta = b_ref[0, i * b_tile + b]

            mu = jnp.mean(seg, axis=1, keepdims=True)               # (C, 1)
            ex2 = jnp.mean(seg * seg, axis=1, keepdims=True)        # independent reduce
            inv_std = lax.rsqrt(ex2 - mu * mu + EPS)                # biased variance

            m = jnp.mean(mu, axis=0, keepdims=True)                 # (1, 1)
            dmu = mu - m
            v = jnp.sum(dmu * dmu, axis=0, keepdims=True) * inv_cm1  # unbiased
            mu_n = dmu * lax.rsqrt(v + EPS)                         # (C, 1)

            scale = gamma * inv_std                                 # (C, 1)
            shift = gamma * (mu_n * alpha - mu * inv_std) + beta    # (C, 1)
            segs.append(seg * scale + shift)
        normed = segs[0] if b_tile == 1 else jnp.concatenate(segs, axis=1)

        # ---- AvgPool2d(5, stride=1, pad=2, count_include_pad) — separable ----
        rowsum = normed
        for dw in (-2, -1, 1, 2):
            rowsum = rowsum + hm[dw] * sh(normed, dw)
        colsum = rowsum
        for dh in (-2, -1, 1, 2):
            colsum = colsum + vm[dh] * sh(rowsum, dh * W)
        pooled = colsum * (1.0 / 25.0)

        # ---- conv3x3 (bias=False): 9 taps fused into one MXU matmul ----------
        taps = []
        t = 0
        for dh in (-1, 0, 1):
            for dw in (-1, 0, 1):
                if dh == 0 and dw == 0:
                    taps.append(pooled)
                else:
                    taps.append(tap_m[t] * sh(pooled, dh * W + dw))
                t += 1
        stacked = jnp.concatenate(taps, axis=0).astype(mxu_dtype)   # (9C, N)
        conv = jnp.dot(w_ref[i], stacked,
                       preferred_element_type=jnp.float32)          # (C, N) f32

        path = conv
        x = x + conv                                                # residual

    o_ref[0] = x


def _pick_b_tile(B, max_tile=32):
    """Largest divisor of B (<= max_tile) that keeps >=2 grid steps (v7x: 2 TCs)."""
    if B <= 1:
        return 1
    best = 1
    for t in range(1, min(B // 2, max_tile) + 1):
        if B % t == 0:
            best = t
    return best


def cond_crp_block(x, embed_weights, conv_w, y, *, mxu_dtype=jnp.bfloat16,
                   b_tile=None):
    """x: (B,C,H,W) f32; embed_weights: (n_stages, num_classes, 3C);
    conv_w: (n_stages, C, C, 3, 3); y: (B,) int class labels."""
    B, C, H, W = x.shape
    n_stages = conv_w.shape[0]
    F = H * W
    if b_tile is None:
        b_tile = _pick_b_tile(B)
    assert B % b_tile == 0
    G = B // b_tile
    N = b_tile * F

    # Embedding lookup + chunk(3) -> gamma, alpha, beta (glue, plain JAX).
    emb = embed_weights[:, y, :]                              # (n_stages, B, 3C)
    gamma, alpha, beta = jnp.split(emb, 3, axis=-1)           # (n_stages, B, C)

    def to_kernel(t):                                         # -> (G, n_stages*b_tile, C, 1)
        t = jnp.transpose(t, (1, 0, 2)).reshape(G, b_tile, n_stages, C)
        t = jnp.transpose(t, (0, 2, 1, 3))                    # (G, n_stages, b_tile, C)
        return t.reshape(G, n_stages * b_tile, C, 1).astype(jnp.float32)

    # Activations: channels on sublanes, (sample, h, w) flattened onto lanes.
    x_k = x.reshape(G, b_tile, C, F)
    x_k = jnp.transpose(x_k, (0, 2, 1, 3)).reshape(G, C, N).astype(jnp.float32)

    # Fused conv weights: (stage, Cout, Cin, 3, 3) -> (stage, Cout, 9*Cin),
    # column index = (kh*3 + kw)*Cin + cin, matching the kernel's tap stacking.
    w_fused = jnp.transpose(conv_w, (0, 1, 3, 4, 2)).reshape(n_stages, C, 9 * C)
    w_fused = w_fused.astype(mxu_dtype)

    # Boundary masks on the flat (b*F + h*W + w) lane axis.
    col = np.arange(F) % W
    row = np.arange(F) // W
    hmask = np.stack([((col + d) >= 0) & ((col + d) < W) for d in range(-2, 3)], 0)
    vmask = np.stack([((row + d) >= 0) & ((row + d) < H) for d in range(-2, 3)], 0)
    tmask = np.stack([hmask[2 + dw] & vmask[2 + dh]
                      for dh in (-1, 0, 1) for dw in (-1, 0, 1)], 0)
    masks = np.concatenate([hmask, vmask, tmask], 0).astype(np.float32)   # (19, F)
    masks = jnp.asarray(np.tile(masks, (1, b_tile)))                      # (19, N)

    kernel = functools.partial(_cond_crp_kernel, n_stages=n_stages, H=H, W=W,
                               b_tile=b_tile, mxu_dtype=mxu_dtype)

    # VMEM per step is tiny at these sizes; raise vmem_limit_bytes if b_tile is
    # ever pushed into the hundreds of samples.
    out_k = pl.pallas_call(
        kernel,
        out_shape=jax.ShapeDtypeStruct((G, C, N), jnp.float32),
        grid=(G,),
        in_specs=[
            pl.BlockSpec((1, C, N), lambda g: (g, 0, 0)),                        # x
            pl.BlockSpec((1, n_stages * b_tile, C, 1), lambda g: (g, 0, 0, 0)),  # gamma
            pl.BlockSpec((1, n_stages * b_tile, C, 1), lambda g: (g, 0, 0, 0)),  # alpha
            pl.BlockSpec((1, n_stages * b_tile, C, 1), lambda g: (g, 0, 0, 0)),  # beta
            pl.BlockSpec((n_stages, C, 9 * C), lambda g: (0, 0, 0)),             # conv W
            pl.BlockSpec((19, N), lambda g: (0, 0)),                             # masks
        ],
        out_specs=pl.BlockSpec((1, C, N), lambda g: (g, 0, 0)),
        compiler_params=pltpu.CompilerParams(dimension_semantics=("parallel",)),
    )(x_k, to_kernel(gamma), to_kernel(alpha), to_kernel(beta), w_fused, masks)

    out = out_k.reshape(G, C, b_tile, F)
    return jnp.transpose(out, (0, 2, 1, 3)).reshape(B, C, H, W)


def ref_forward(x, embed_weights, conv_w, y, conv_operand_dtype=jnp.float32):
    """Pure-JAX reference mirroring the PyTorch forward (NCHW).

    `conv_operand_dtype=jnp.bfloat16` rounds the conv operands like the kernel's
    bf16 MXU path (accumulation stays f32) so the comparison can be tight."""
    B, C, H, W = x.shape
    n_stages = conv_w.shape[0]
    emb = embed_weights[:, y, :]
    gamma, alpha, beta = jnp.split(emb, 3, axis=-1)

    x = jnp.maximum(x, 0.0)
    path = x
    for i in range(n_stages):
        g = gamma[i][:, :, None, None]
        a = alpha[i][:, :, None, None]
        b = beta[i][:, :, None, None]

        means = jnp.mean(path, axis=(2, 3))                      # (B, C)
        m = jnp.mean(means, axis=-1, keepdims=True)
        v = jnp.var(means, axis=-1, keepdims=True, ddof=1)       # torch unbiased var
        means_n = (means - m) / jnp.sqrt(v + EPS)

        mu = jnp.mean(path, axis=(2, 3), keepdims=True)
        var = jnp.var(path, axis=(2, 3), keepdims=True)          # biased (InstanceNorm2d)
        h = (path - mu) / jnp.sqrt(var + EPS)
        h = h + means_n[:, :, None, None] * a
        normed = g * h + b

        pooled = lax.reduce_window(normed, 0.0, lax.add,
                                   (1, 1, 5, 5), (1, 1, 1, 1),
                                   ((0, 0), (0, 0), (2, 2), (2, 2))) / 25.0

        p_c = pooled.astype(conv_operand_dtype).astype(jnp.float32)
        w_c = conv_w[i].astype(conv_operand_dtype).astype(jnp.float32)
        path = lax.conv_general_dilated(p_c, w_c, (1, 1), ((1, 1), (1, 1)),
                                        dimension_numbers=("NCHW", "OIHW", "NCHW"),
                                        precision=lax.Precision.HIGHEST)
        x = path + x
    return x


if __name__ == "__main__":
    B, C, H, W = 2, 8, 16, 16
    N_STAGES = 2
    NUM_CLASSES = 3

    key = jax.random.PRNGKey(0)
    k1, k2, k3, k4 = jax.random.split(key, 4)

    x = jax.random.normal(k1, (B, C, H, W), jnp.float32)
    y = jax.random.randint(k2, (B,), 0, NUM_CLASSES)

    # Embedding init (per stage): [:, :2C] ~ N(1, 0.02), [:, 2C:] = 0
    embed_weights = jnp.concatenate(
        [1.0 + 0.02 * jax.random.normal(k3, (N_STAGES, NUM_CLASSES, 2 * C), jnp.float32),
         jnp.zeros((N_STAGES, NUM_CLASSES, C), jnp.float32)],
        axis=-1,
    )

    # conv3x3 weights, kaiming-uniform-like bound 1/sqrt(fan_in)
    bound = 1.0 / math.sqrt(C * 9)
    conv_w = jax.random.uniform(k4, (N_STAGES, C, C, 3, 3), jnp.float32, -bound, bound)

    out = jax.block_until_ready(cond_crp_block(x, embed_weights, conv_w, y))
    assert out.shape == (B, C, H, W)

    # Tight structural check against a reference that rounds conv operands the
    # same way the bf16 MXU path does (f32 accumulation in both).
    ref_bf16 = jax.block_until_ready(
        ref_forward(x, embed_weights, conv_w, y, conv_operand_dtype=jnp.bfloat16))
    np.testing.assert_allclose(np.asarray(out), np.asarray(ref_bf16),
                               atol=2e-3, rtol=2e-3)

    # Loose sanity check against the pure-f32 reference (bf16 operand rounding).
    ref_f32 = jax.block_until_ready(ref_forward(x, embed_weights, conv_w, y))
    np.testing.assert_allclose(np.asarray(out), np.asarray(ref_f32),
                               atol=3e-2, rtol=3e-2)

    print("KERNEL_OK")
</pallas_src>

<mosaic_0001>
module attributes {stable_mosaic.version = 11 : i64} {
  func.func @_cond_crp_kernel(%arg0: i32, %arg1: memref<1x8x256xf32, #tpu.memory_space<vmem>>, %arg2: memref<1x2x8x1xf32, #tpu.memory_space<vmem>>, %arg3: memref<1x2x8x1xf32, #tpu.memory_space<vmem>>, %arg4: memref<1x2x8x1xf32, #tpu.memory_space<vmem>>, %arg5: memref<2x8x72xbf16, #tpu.memory_space<vmem>>, %arg6: memref<19x256xf32, #tpu.memory_space<vmem>>, %arg7: memref<1x8x256xf32, #tpu.memory_space<vmem>>) attributes {dimension_semantics = [#tpu.dimension_semantics<parallel>], iteration_bounds = array<i64: 2>, scalar_prefetch = 0 : i64, scratch_operands = 0 : i64, tpu.core_type = #tpu.core_type<tc>, window_params = [{transform_indices = @transform_0, window_bounds = array<i64: 1, 8, 256>}, {transform_indices = @transform_1, window_bounds = array<i64: 1, 2, 8, 1>}, {transform_indices = @transform_2, window_bounds = array<i64: 1, 2, 8, 1>}, {transform_indices = @transform_3, window_bounds = array<i64: 1, 2, 8, 1>}, {pipeline_mode = #tpu.pipeline_mode<synchronous>, transform_indices = @transform_4, window_bounds = array<i64: 2, 8, 72>}, {pipeline_mode = #tpu.pipeline_mode<synchronous>, transform_indices = @transform_5, window_bounds = array<i64: 19, 256>}, {transform_indices = @transform_6, window_bounds = array<i64: 1, 8, 256>}]} {
    %c0 = arith.constant 0 : index
    %c0_0 = arith.constant 0 : index
    %0 = vector.load %arg6[%c0, %c0_0] : memref<19x256xf32, #tpu.memory_space<vmem>>, vector<1x256xf32>
    %c1 = arith.constant 1 : index
    %c0_1 = arith.constant 0 : index
    %1 = vector.load %arg6[%c1, %c0_1] : memref<19x256xf32, #tpu.memory_space<vmem>>, vector<1x256xf32>
    %c3 = arith.constant 3 : index
    %c0_2 = arith.constant 0 : index
    %2 = vector.load %arg6[%c3, %c0_2] : memref<19x256xf32, #tpu.memory_space<vmem>>, vector<1x256xf32>
    %c4 = arith.constant 4 : index
    %c0_3 = arith.constant 0 : index
    %3 = vector.load %arg6[%c4, %c0_3] : memref<19x256xf32, #tpu.memory_space<vmem>>, vector<1x256xf32>
    %c5 = arith.constant 5 : index
    %c0_4 = arith.constant 0 : index
    %4 = vector.load %arg6[%c5, %c0_4] : memref<19x256xf32, #tpu.memory_space<vmem>>, vector<1x256xf32>
    %c6 = arith.constant 6 : index
    %c0_5 = arith.constant 0 : index
    %5 = vector.load %arg6[%c6, %c0_5] : memref<19x256xf32, #tpu.memory_space<vmem>>, vector<1x256xf32>
    %c8 = arith.constant 8 : index
    %c0_6 = arith.constant 0 : index
    %6 = vector.load %arg6[%c8, %c0_6] : memref<19x256xf32, #tpu.memory_space<vmem>>, vector<1x256xf32>
    %c9 = arith.constant 9 : index
    %c0_7 = arith.constant 0 : index
    %7 = vector.load %arg6[%c9, %c0_7] : memref<19x256xf32, #tpu.memory_space<vmem>>, vector<1x256xf32>
    %c10 = arith.constant 10 : index
    %c0_8 = arith.constant 0 : index
    %8 = vector.load %arg6[%c10, %c0_8] : memref<19x256xf32, #tpu.memory_space<vmem>>, vector<1x256xf32>
    %c11 = arith.constant 11 : index
    %c0_9 = arith.constant 0 : index
    %9 = vector.load %arg6[%c11, %c0_9] : memref<19x256xf32, #tpu.memory_space<vmem>>, vector<1x256xf32>
    %c12 = arith.constant 12 : index
    %c0_10 = arith.constant 0 : index
    %10 = vector.load %arg6[%c12, %c0_10] : memref<19x256xf32, #tpu.memory_space<vmem>>, vector<1x256xf32>
    %c13 = arith.constant 13 : index
    %c0_11 = arith.constant 0 : index
    %11 = vector.load %arg6[%c13, %c0_11] : memref<19x256xf32, #tpu.memory_space<vmem>>, vector<1x256xf32>
    %c15 = arith.constant 15 : index
    %c0_12 = arith.constant 0 : index
    %12 = vector.load %arg6[%c15, %c0_12] : memref<19x256xf32, #tpu.memory_space<vmem>>, vector<1x256xf32>
    %c16 = arith.constant 16 : index
    %c0_13 = arith.constant 0 : index
    %13 = vector.load %arg6[%c16, %c0_13] : memref<19x256xf32, #tpu.memory_space<vmem>>, vector<1x256xf32>
    %c17 = arith.constant 17 : index
    %c0_14 = arith.constant 0 : index
    %14 = vector.load %arg6[%c17, %c0_14] : memref<19x256xf32, #tpu.memory_space<vmem>>, vector<1x256xf32>
    %c18 = arith.constant 18 : index
    %c0_15 = arith.constant 0 : index
    %15 = vector.load %arg6[%c18, %c0_15] : memref<19x256xf32, #tpu.memory_space<vmem>>, vector<1x256xf32>
    %c0_16 = arith.constant 0 : index
    %c0_17 = arith.constant 0 : index
    %c0_18 = arith.constant 0 : index
    %16 = vector.load %arg1[%c0_16, %c0_17, %c0_18] : memref<1x8x256xf32, #tpu.memory_space<vmem>>, vector<1x8x256xf32>
    %17 = vector.shape_cast %16 : vector<1x8x256xf32> to vector<8x256xf32>
    %cst = arith.constant 0.000000e+00 : f32
    %18 = vector.broadcast %cst : f32 to vector<8x256xf32>
    %19 = arith.maximumf %17, %18 : vector<8x256xf32>
    %c0_19 = arith.constant 0 : index
    %c0_20 = arith.constant 0 : index
    %c0_21 = arith.constant 0 : index
    %c0_22 = arith.constant 0 : index
    %20 = vector.load %arg2[%c0_19, %c0_20, %c0_21, %c0_22] : memref<1x2x8x1xf32, #tpu.memory_space<vmem>>, vector<1x1x8x1xf32>
    %21 = vector.shape_cast %20 : vector<1x1x8x1xf32> to vector<8x1xf32>
    %c0_23 = arith.constant 0 : index
    %c0_24 = arith.constant 0 : index
    %c0_25 = arith.constant 0 : index
    %c0_26 = arith.constant 0 : index
    %22 = vector.load %arg3[%c0_23, %c0_24, %c0_25, %c0_26] : memref<1x2x8x1xf32, #tpu.memory_space<vmem>>, vector<1x1x8x1xf32>
    %23 = vector.shape_cast %22 : vector<1x1x8x1xf32> to vector<8x1xf32>
    %c0_27 = arith.constant 0 : index
    %c0_28 = arith.constant 0 : index
    %c0_29 = arith.constant 0 : index
    %c0_30 = arith.constant 0 : index
    %24 = vector.load %arg4[%c0_27, %c0_28, %c0_29, %c0_30] : memref<1x2x8x1xf32, #tpu.memory_space<vmem>>, vector<1x1x8x1xf32>
    %25 = vector.shape_cast %24 : vector<1x1x8x1xf32> to vector<8x1xf32>
    %cst_31 = arith.constant dense<0.000000e+00> : vector<8xf32>
    %26 = vector.multi_reduction <add>, %19, %cst_31 [1] : vector<8x256xf32> to vector<8xf32>
    %27 = vector.shape_cast %26 : vector<8xf32> to vector<8x1xf32>
    %cst_32 = arith.constant 2.560000e+02 : f32
    %28 = vector.broadcast %cst_32 : f32 to vector<8x1xf32>
    %29 = arith.divf %27, %28 : vector<8x1xf32>
    %30 = arith.mulf %19, %19 : vector<8x256xf32>
    %cst_33 = arith.constant dense<0.000000e+00> : vector<8xf32>
    %31 = vector.multi_reduction <add>, %30, %cst_33 [1] : vector<8x256xf32> to vector<8xf32>
    %32 = vector.shape_cast %31 : vector<8xf32> to vector<8x1xf32>
    %cst_34 = arith.constant 2.560000e+02 : f32
    %33 = vector.broadcast %cst_34 : f32 to vector<8x1xf32>
    %34 = arith.divf %32, %33 : vector<8x1xf32>
    %35 = arith.mulf %29, %29 : vector<8x1xf32>
    %36 = arith.subf %34, %35 : vector<8x1xf32>
    %cst_35 = arith.constant 9.99999974E-6 : f32
    %37 = vector.broadcast %cst_35 : f32 to vector<8x1xf32>
    %38 = arith.addf %36, %37 : vector<8x1xf32>
    %39 = math.rsqrt %38 : vector<8x1xf32>
    %cst_36 = arith.constant dense<0.000000e+00> : vector<1xf32>
    %40 = vector.multi_reduction <add>, %29, %cst_36 [0] : vector<8x1xf32> to vector<1xf32>
    %41 = vector.shape_cast %40 : vector<1xf32> to vector<1x1xf32>
    %cst_37 = arith.constant 8.000000e+00 : f32
    %42 = vector.broadcast %cst_37 : f32 to vector<1x1xf32>
    %43 = arith.divf %41, %42 : vector<1x1xf32>
    %44 = vector.broadcast %43 : vector<1x1xf32> to vector<8x1xf32>
    %45 = arith.subf %29, %44 : vector<8x1xf32>
    %46 = arith.mulf %45, %45 : vector<8x1xf32>
    %cst_38 = arith.constant dense<0.000000e+00> : vector<1xf32>
    %47 = vector.multi_reduction <add>, %46, %cst_38 [0] : vector<8x1xf32> to vector<1xf32>
    %48 = vector.shape_cast %47 : vector<1xf32> to vector<1x1xf32>
    %cst_39 = arith.constant 0.142857149 : f32
    %49 = vector.broadcast %cst_39 : f32 to vector<1x1xf32>
    %50 = arith.mulf %48, %49 : vector<1x1xf32>
    %cst_40 = arith.constant 9.99999974E-6 : f32
    %51 = vector.broadcast %cst_40 : f32 to vector<1x1xf32>
    %52 = arith.addf %50, %51 : vector<1x1xf32>
    %53 = math.rsqrt %52 : vector<1x1xf32>
    %54 = vector.broadcast %53 : vector<1x1xf32> to vector<8x1xf32>
    %55 = arith.mulf %45, %54 : vector<8x1xf32>
    %56 = arith.mulf %21, %39 : vector<8x1xf32>
    %57 = arith.mulf %55, %23 : vector<8x1xf32>
    %58 = arith.mulf %29, %39 : vector<8x1xf32>
    %59 = arith.subf %57, %58 : vector<8x1xf32>
    %60 = arith.mulf %21, %59 : vector<8x1xf32>
    %61 = arith.addf %60, %25 : vector<8x1xf32>
    %62 = vector.broadcast %56 : vector<8x1xf32> to vector<8x256xf32>
    %63 = arith.mulf %19, %62 : vector<8x256xf32>
    %64 = vector.broadcast %61 : vector<8x1xf32> to vector<8x256xf32>
    %65 = arith.addf %63, %64 : vector<8x256xf32>
    %c2_i32 = arith.constant 2 : i32
    %66 = tpu.dynamic_rotate %65 by %c2_i32 dim 1 : vector<8x256xf32>, i32 -> vector<8x256xf32>
    %67 = vector.broadcast %0 : vector<1x256xf32> to vector<8x256xf32>
    %68 = arith.mulf %67, %66 : vector<8x256xf32>
    %69 = arith.addf %65, %68 : vector<8x256xf32>
    %c1_i32 = arith.constant 1 : i32
    %70 = tpu.dynamic_rotate %65 by %c1_i32 dim 1 : vector<8x256xf32>, i32 -> vector<8x256xf32>
    %71 = vector.broadcast %1 : vector<1x256xf32> to vector<8x256xf32>
    %72 = arith.mulf %71, %70 : vector<8x256xf32>
    %73 = arith.addf %69, %72 : vector<8x256xf32>
    %c255_i32 = arith.constant 255 : i32
    %74 = tpu.dynamic_rotate %65 by %c255_i32 dim 1 : vector<8x256xf32>, i32 -> vector<8x256xf32>
    %75 = vector.broadcast %2 : vector<1x256xf32> to vector<8x256xf32>
    %76 = arith.mulf %75, %74 : vector<8x256xf32>
    %77 = arith.addf %73, %76 : vector<8x256xf32>
    %c254_i32 = arith.constant 254 : i32
    %78 = tpu.dynamic_rotate %65 by %c254_i32 dim 1 : vector<8x256xf32>, i32 -> vector<8x256xf32>
    %79 = vector.broadcast %3 : vector<1x256xf32> to vector<8x256xf32>
    %80 = arith.mulf %79, %78 : vector<8x256xf32>
    %81 = arith.addf %77, %80 : vector<8x256xf32>
    %c32_i32 = arith.constant 32 : i32
    %82 = tpu.dynamic_rotate %81 by %c32_i32 dim 1 : vector<8x256xf32>, i32 -> vector<8x256xf32>
    %83 = vector.broadcast %4 : vector<1x256xf32> to vector<8x256xf32>
    %84 = arith.mulf %83, %82 : vector<8x256xf32>
    %85 = arith.addf %81, %84 : vector<8x256xf32>
    %c16_i32 = arith.constant 16 : i32
    %86 = tpu.dynamic_rotate %81 by %c16_i32 dim 1 : vector<8x256xf32>, i32 -> vector<8x256xf32>
    %87 = vector.broadcast %5 : vector<1x256xf32> to vector<8x256xf32>
    %88 = arith.mulf %87, %86 : vector<8x256xf32>
    %89 = arith.addf %85, %88 : vector<8x256xf32>
    %c240_i32 = arith.constant 240 : i32
    %90 = tpu.dynamic_rotate %81 by %c240_i32 dim 1 : vector<8x256xf32>, i32 -> vector<8x256xf32>
    %91 = vector.broadcast %6 : vector<1x256xf32> to vector<8x256xf32>
    %92 = arith.mulf %91, %90 : vector<8x256xf32>
    %93 = arith.addf %89, %92 : vector<8x256xf32>
    %c224_i32 = arith.constant 224 : i32
    %94 = tpu.dynamic_rotate %81 by %c224_i32 dim 1 : vector<8x256xf32>, i32 -> vector<8x256xf32>
    %95 = vector.broadcast %7 : vector<1x256xf32> to vector<8x256xf32>
    %96 = arith.mulf %95, %94 : vector<8x256xf32>
    %97 = arith.addf %93, %96 : vector<8x256xf32>
    %cst_41 = arith.constant 4.000000e-02 : f32
    %98 = vector.broadcast %cst_41 : f32 to vector<8x256xf32>
    %99 = arith.mulf %97, %98 : vector<8x256xf32>
    %c17_i32 = arith.constant 17 : i32
    %100 = tpu.dynamic_rotate %99 by %c17_i32 dim 1 : vector<8x256xf32>, i32 -> vector<8x256xf32>
    %101 = vector.broadcast %8 : vector<1x256xf32> to vector<8x256xf32>
    %102 = arith.mulf %101, %100 : vector<8x256xf32>
    %c16_i32_42 = arith.constant 16 : i32
    %103 = tpu.dynamic_rotate %99 by %c16_i32_42 dim 1 : vector<8x256xf32>, i32 -> vector<8x256xf32>
    %104 = vector.broadcast %9 : vector<1x256xf32> to vector<8x256xf32>
    %105 = arith.mulf %104, %103 : vector<8x256xf32>
    %c15_i32 = arith.constant 15 : i32
    %106 = tpu.dynamic_rotate %99 by %c15_i32 dim 1 : vector<8x256xf32>, i32 -> vector<8x256xf32>
    %107 = vector.broadcast %10 : vector<1x256xf32> to vector<8x256xf32>
    %108 = arith.mulf %107, %106 : vector<8x256xf32>
    %c1_i32_43 = arith.constant 1 : i32
    %109 = tpu.dynamic_rotate %99 by %c1_i32_43 dim 1 : vector<8x256xf32>, i32 -> vector<8x256xf32>
    %110 = vector.broadcast %11 : vector<1x256xf32> to vector<8x256xf32>
    %111 = arith.mulf %110, %109 : vector<8x256xf32>
    %c255_i32_44 = arith.constant 255 : i32
    %112 = tpu.dynamic_rotate %99 by %c255_i32_44 dim 1 : vector<8x256xf32>, i32 -> vector<8x256xf32>
    %113 = vector.broadcast %12 : vector<1x256xf32> to vector<8x256xf32>
    %114 = arith.mulf %113, %112 : vector<8x256xf32>
    %c241_i32 = arith.constant 241 : i32
    %115 = tpu.dynamic_rotate %99 by %c241_i32 dim 1 : vector<8x256xf32>, i32 -> vector<8x256xf32>
    %116 = vector.broadcast %13 : vector<1x256xf32> to vector<8x256xf32>
    %117 = arith.mulf %116, %115 : vector<8x256xf32>
    %c240_i32_45 = arith.constant 240 : i32
    %118 = tpu.dynamic_rotate %99 by %c240_i32_45 dim 1 : vector<8x256xf32>, i32 -> vector<8x256xf32>
    %119 = vector.broadcast %14 : vector<1x256xf32> to vector<8x256xf32>
    %120 = arith.mulf %119, %118 : vector<8x256xf32>
    %c239_i32 = arith.constant 239 : i32
    %121 = tpu.dynamic_rotate %99 by %c239_i32 dim 1 : vector<8x256xf32>, i32 -> vector<8x256xf32>
    %122 = vector.broadcast %15 : vector<1x256xf32> to vector<8x256xf32>
    %123 = arith.mulf %122, %121 : vector<8x256xf32>
    %124 = tpu.concatenate %102, %105, %108, %111, %99, %114, %117, %120, %123 in 0 : vector<8x256xf32>, vector<8x256xf32>, vector<8x256xf32>, vector<8x256xf32>, vector<8x256xf32>, vector<8x256xf32>, vector<8x256xf32>, vector<8x256xf32>, vector<8x256xf32> -> vector<72x256xf32>
    %125 = arith.truncf %124 : vector<72x256xf32> to vector<72x256xbf16>
    %c0_46 = arith.constant 0 : index
    %c0_47 = arith.constant 0 : index
    %c0_48 = arith.constant 0 : index
    %126 = vector.load %arg5[%c0_46, %c0_47, %c0_48] : memref<2x8x72xbf16, #tpu.memory_space<vmem>>, vector<1x8x72xbf16>
    %127 = vector.shape_cast %126 : vector<1x8x72xbf16> to vector<8x72xbf16>
    %cst_49 = arith.constant dense<0.000000e+00> : vector<8x256xf32>
    %128 = tpu.matmul %127, %125, %cst_49 {dimension_numbers = #tpu.dot_dimension_numbers<[1], [0], [0], [1], [0, 0, 1, 1], [], []>} : vector<8x72xbf16>, vector<72x256xbf16>, vector<8x256xf32> -> vector<8x256xf32>
    %129 = arith.addf %19, %128 : vector<8x256xf32>
    %c0_50 = arith.constant 0 : index
    %c1_51 = arith.constant 1 : index
    %c0_52 = arith.constant 0 : index
    %c0_53 = arith.constant 0 : index
    %130 = vector.load %arg2[%c0_50, %c1_51, %c0_52, %c0_53] : memref<1x2x8x1xf32, #tpu.memory_space<vmem>>, vector<1x1x8x1xf32>
    %131 = vector.shape_cast %130 : vector<1x1x8x1xf32> to vector<8x1xf32>
    %c0_54 = arith.constant 0 : index
    %c1_55 = arith.constant 1 : index
    %c0_56 = arith.constant 0 : index
    %c0_57 = arith.constant 0 : index
    %132 = vector.load %arg3[%c0_54, %c1_55, %c0_56, %c0_57] : memref<1x2x8x1xf32, #tpu.memory_space<vmem>>, vector<1x1x8x1xf32>
    %133 = vector.shape_cast %132 : vector<1x1x8x1xf32> to vector<8x1xf32>
    %c0_58 = arith.constant 0 : index
    %c1_59 = arith.constant 1 : index
    %c0_60 = arith.constant 0 : index
    %c0_61 = arith.constant 0 : index
    %134 = vector.load %arg4[%c0_58, %c1_59, %c0_60, %c0_61] : memref<1x2x8x1xf32, #tpu.memory_space<vmem>>, vector<1x1x8x1xf32>
    %135 = vector.shape_cast %134 : vector<1x1x8x1xf32> to vector<8x1xf32>
    %cst_62 = arith.constant dense<0.000000e+00> : vector<8xf32>
    %136 = vector.multi_reduction <add>, %128, %cst_62 [1] : vector<8x256xf32> to vector<8xf32>
    %137 = vector.shape_cast %136 : vector<8xf32> to vector<8x1xf32>
    %cst_63 = arith.constant 2.560000e+02 : f32
    %138 = vector.broadcast %cst_63 : f32 to vector<8x1xf32>
    %139 = arith.divf %137, %138 : vector<8x1xf32>
    %140 = arith.mulf %128, %128 : vector<8x256xf32>
    %cst_64 = arith.constant dense<0.000000e+00> : vector<8xf32>
    %141 = vector.multi_reduction <add>, %140, %cst_64 [1] : vector<8x256xf32> to vector<8xf32>
    %142 = vector.shape_cast %141 : vector<8xf32> to vector<8x1xf32>
    %cst_65 = arith.constant 2.560000e+02 : f32
    %143 = vector.broadcast %cst_65 : f32 to vector<8x1xf32>
    %144 = arith.divf %142, %143 : vector<8x1xf32>
    %145 = arith.mulf %139, %139 : vector<8x1xf32>
    %146 = arith.subf %144, %145 : vector<8x1xf32>
    %cst_66 = arith.constant 9.99999974E-6 : f32
    %147 = vector.broadcast %cst_66 : f32 to vector<8x1xf32>
    %148 = arith.addf %146, %147 : vector<8x1xf32>
    %149 = math.rsqrt %148 : vector<8x1xf32>
    %cst_67 = arith.constant dense<0.000000e+00> : vector<1xf32>
    %150 = vector.multi_reduction <add>, %139, %cst_67 [0] : vector<8x1xf32> to vector<1xf32>
    %151 = vector.shape_cast %150 : vector<1xf32> to vector<1x1xf32>
    %cst_68 = arith.constant 8.000000e+00 : f32
    %152 = vector.broadcast %cst_68 : f32 to vector<1x1xf32>
    %153 = arith.divf %151, %152 : vector<1x1xf32>
    %154 = vector.broadcast %153 : vector<1x1xf32> to vector<8x1xf32>
    %155 = arith.subf %139, %154 : vector<8x1xf32>
    %156 = arith.mulf %155, %155 : vector<8x1xf32>
    %cst_69 = arith.constant dense<0.000000e+00> : vector<1xf32>
    %157 = vector.multi_reduction <add>, %156, %cst_69 [0] : vector<8x1xf32> to vector<1xf32>
    %158 = vector.shape_cast %157 : vector<1xf32> to vector<1x1xf32>
    %cst_70 = arith.constant 0.142857149 : f32
    %159 = vector.broadcast %cst_70 : f32 to vector<1x1xf32>
    %160 = arith.mulf %158, %159 : vector<1x1xf32>
    %cst_71 = arith.constant 9.99999974E-6 : f32
    %161 = vector.broadcast %cst_71 : f32 to vector<1x1xf32>
    %162 = arith.addf %160, %161 : vector<1x1xf32>
    %163 = math.rsqrt %162 : vector<1x1xf32>
    %164 = vector.broadcast %163 : vector<1x1xf32> to vector<8x1xf32>
    %165 = arith.mulf %155, %164 : vector<8x1xf32>
    %166 = arith.mulf %131, %149 : vector<8x1xf32>
    %167 = arith.mulf %165, %133 : vector<8x1xf32>
    %168 = arith.mulf %139, %149 : vector<8x1xf32>
    %169 = arith.subf %167, %168 : vector<8x1xf32>
    %170 = arith.mulf %131, %169 : vector<8x1xf32>
    %171 = arith.addf %170, %135 : vector<8x1xf32>
    %172 = vector.broadcast %166 : vector<8x1xf32> to vector<8x256xf32>
    %173 = arith.mulf %128, %172 : vector<8x256xf32>
    %174 = vector.broadcast %171 : vector<8x1xf32> to vector<8x256xf32>
    %175 = arith.addf %173, %174 : vector<8x256xf32>
    %c2_i32_72 = arith.constant 2 : i32
    %176 = tpu.dynamic_rotate %175 by %c2_i32_72 dim 1 : vector<8x256xf32>, i32 -> vector<8x256xf32>
    %177 = vector.broadcast %0 : vector<1x256xf32> to vector<8x256xf32>
    %178 = arith.mulf %177, %176 : vector<8x256xf32>
    %179 = arith.addf %175, %178 : vector<8x256xf32>
    %c1_i32_73 = arith.constant 1 : i32
    %180 = tpu.dynamic_rotate %175 by %c1_i32_73 dim 1 : vector<8x256xf32>, i32 -> vector<8x256xf32>
    %181 = vector.broadcast %1 : vector<1x256xf32> to vector<8x256xf32>
    %182 = arith.mulf %181, %180 : vector<8x256xf32>
    %183 = arith.addf %179, %182 : vector<8x256xf32>
    %c255_i32_74 = arith.constant 255 : i32
    %184 = tpu.dynamic_rotate %175 by %c255_i32_74 dim 1 : vector<8x256xf32>, i32 -> vector<8x256xf32>
    %185 = vector.broadcast %2 : vector<1x256xf32> to vector<8x256xf32>
    %186 = arith.mulf %185, %184 : vector<8x256xf32>
    %187 = arith.addf %183, %186 : vector<8x256xf32>
    %c254_i32_75 = arith.constant 254 : i32
    %188 = tpu.dynamic_rotate %175 by %c254_i32_75 dim 1 : vector<8x256xf32>, i32 -> vector<8x256xf32>
    %189 = vector.broadcast %3 : vector<1x256xf32> to vector<8x256xf32>
    %190 = arith.mulf %189, %188 : vector<8x256xf32>
    %191 = arith.addf %187, %190 : vector<8x256xf32>
    %c32_i32_76 = arith.constant 32 : i32
    %192 = tpu.dynamic_rotate %191 by %c32_i32_76 dim 1 : vector<8x256xf32>, i32 -> vector<8x256xf32>
    %193 = vector.broadcast %4 : vector<1x256xf32> to vector<8x256xf32>
    %194 = arith.mulf %193, %192 : vector<8x256xf32>
    %195 = arith.addf %191, %194 : vector<8x256xf32>
    %c16_i32_77 = arith.constant 16 : i32
    %196 = tpu.dynamic_rotate %191 by %c16_i32_77 dim 1 : vector<8x256xf32>, i32 -> vector<8x256xf32>
    %197 = vector.broadcast %5 : vector<1x256xf32> to vector<8x256xf32>
    %198 = arith.mulf %197, %196 : vector<8x256xf32>
    %199 = arith.addf %195, %198 : vector<8x256xf32>
    %c240_i32_78 = arith.constant 240 : i32
    %200 = tpu.dynamic_rotate %191 by %c240_i32_78 dim 1 : vector<8x256xf32>, i32 -> vector<8x256xf32>
    %201 = vector.broadcast %6 : vector<1x256xf32> to vector<8x256xf32>
    %202 = arith.mulf %201, %200 : vector<8x256xf32>
    %203 = arith.addf %199, %202 : vector<8x256xf32>
    %c224_i32_79 = arith.constant 224 : i32
    %204 = tpu.dynamic_rotate %191 by %c224_i32_79 dim 1 : vector<8x256xf32>, i32 -> vector<8x256xf32>
    %205 = vector.broadcast %7 : vector<1x256xf32> to vector<8x256xf32>
    %206 = arith.mulf %205, %204 : vector<8x256xf32>
    %207 = arith.addf %203, %206 : vector<8x256xf32>
    %cst_80 = arith.constant 4.000000e-02 : f32
    %208 = vector.broadcast %cst_80 : f32 to vector<8x256xf32>
    %209 = arith.mulf %207, %208 : vector<8x256xf32>
    %c17_i32_81 = arith.constant 17 : i32
    %210 = tpu.dynamic_rotate %209 by %c17_i32_81 dim 1 : vector<8x256xf32>, i32 -> vector<8x256xf32>
    %211 = vector.broadcast %8 : vector<1x256xf32> to vector<8x256xf32>
    %212 = arith.mulf %211, %210 : vector<8x256xf32>
    %c16_i32_82 = arith.constant 16 : i32
    %213 = tpu.dynamic_rotate %209 by %c16_i32_82 dim 1 : vector<8x256xf32>, i32 -> vector<8x256xf32>
    %214 = vector.broadcast %9 : vector<1x256xf32> to vector<8x256xf32>
    %215 = arith.mulf %214, %213 : vector<8x256xf32>
    %c15_i32_83 = arith.constant 15 : i32
    %216 = tpu.dynamic_rotate %209 by %c15_i32_83 dim 1 : vector<8x256xf32>, i32 -> vector<8x256xf32>
    %217 = vector.broadcast %10 : vector<1x256xf32> to vector<8x256xf32>
    %218 = arith.mulf %217, %216 : vector<8x256xf32>
    %c1_i32_84 = arith.constant 1 : i32
    %219 = tpu.dynamic_rotate %209 by %c1_i32_84 dim 1 : vector<8x256xf32>, i32 -> vector<8x256xf32>
    %220 = vector.broadcast %11 : vector<1x256xf32> to vector<8x256xf32>
    %221 = arith.mulf %220, %219 : vector<8x256xf32>
    %c255_i32_85 = arith.constant 255 : i32
    %222 = tpu.dynamic_rotate %209 by %c255_i32_85 dim 1 : vector<8x256xf32>, i32 -> vector<8x256xf32>
    %223 = vector.broadcast %12 : vector<1x256xf32> to vector<8x256xf32>
    %224 = arith.mulf %223, %222 : vector<8x256xf32>
    %c241_i32_86 = arith.constant 241 : i32
    %225 = tpu.dynamic_rotate %209 by %c241_i32_86 dim 1 : vector<8x256xf32>, i32 -> vector<8x256xf32>
    %226 = vector.broadcast %13 : vector<1x256xf32> to vector<8x256xf32>
    %227 = arith.mulf %226, %225 : vector<8x256xf32>
    %c240_i32_87 = arith.constant 240 : i32
    %228 = tpu.dynamic_rotate %209 by %c240_i32_87 dim 1 : vector<8x256xf32>, i32 -> vector<8x256xf32>
    %229 = vector.broadcast %14 : vector<1x256xf32> to vector<8x256xf32>
    %230 = arith.mulf %229, %228 : vector<8x256xf32>
    %c239_i32_88 = arith.constant 239 : i32
    %231 = tpu.dynamic_rotate %209 by %c239_i32_88 dim 1 : vector<8x256xf32>, i32 -> vector<8x256xf32>
    %232 = vector.broadcast %15 : vector<1x256xf32> to vector<8x256xf32>
    %233 = arith.mulf %232, %231 : vector<8x256xf32>
    %234 = tpu.concatenate %212, %215, %218, %221, %209, %224, %227, %230, %233 in 0 : vector<8x256xf32>, vector<8x256xf32>, vector<8x256xf32>, vector<8x256xf32>, vector<8x256xf32>, vector<8x256xf32>, vector<8x256xf32>, vector<8x256xf32>, vector<8x256xf32> -> vector<72x256xf32>
    %235 = arith.truncf %234 : vector<72x256xf32> to vector<72x256xbf16>
    %c1_89 = arith.constant 1 : index
    %c0_90 = arith.constant 0 : index
    %c0_91 = arith.constant 0 : index
    %236 = vector.load %arg5[%c1_89, %c0_90, %c0_91] : memref<2x8x72xbf16, #tpu.memory_space<vmem>>, vector<1x8x72xbf16>
    %237 = vector.shape_cast %236 : vector<1x8x72xbf16> to vector<8x72xbf16>
    %cst_92 = arith.constant dense<0.000000e+00> : vector<8x256xf32>
    %238 = tpu.matmul %237, %235, %cst_92 {dimension_numbers = #tpu.dot_dimension_numbers<[1], [0], [0], [1], [0, 0, 1, 1], [], []>} : vector<8x72xbf16>, vector<72x256xbf16>, vector<8x256xf32> -> vector<8x256xf32>
    %239 = arith.addf %129, %238 : vector<8x256xf32>
    %c0_93 = arith.constant 0 : index
    %c0_94 = arith.constant 0 : index
    %c0_95 = arith.constant 0 : index
    %240 = vector.load %arg7[%c0_93, %c0_94, %c0_95] : memref<1x8x256xf32, #tpu.memory_space<vmem>>, vector<1x8x256xf32>
    %241 = vector.shape_cast %240 : vector<1x8x256xf32> to vector<8x256xf32>
    %242 = vector.shape_cast %239 : vector<8x256xf32> to vector<1x8x256xf32>
    tpu.vector_store %arg7[%c0_93, %c0_94, %c0_95], %242 {strides = array<i32>} : memref<1x8x256xf32, #tpu.memory_space<vmem>>, vector<1x8x256xf32>,
    return
  }
  func.func @transform_0(%arg0: i32) -> (i32, i32, i32) {
    %c0_i32 = arith.constant 0 : i32
    %c0_i32_0 = arith.constant 0 : i32
    %c0_i32_1 = arith.constant 0 : i32
    return %arg0, %c0_i32, %c0_i32_0 : i32, i32, i32
  }
  func.func @transform_1(%arg0: i32) -> (i32, i32, i32, i32) {
    %c0_i32 = arith.constant 0 : i32
    %c0_i32_0 = arith.constant 0 : i32
    %c0_i32_1 = arith.constant 0 : i32
    %c0_i32_2 = arith.constant 0 : i32
    return %arg0, %c0_i32, %c0_i32_0, %c0_i32_1 : i32, i32, i32, i32
  }
  func.func @transform_2(%arg0: i32) -> (i32, i32, i32, i32) {
    %c0_i32 = arith.constant 0 : i32
    %c0_i32_0 = arith.constant 0 : i32
    %c0_i32_1 = arith.constant 0 : i32
    %c0_i32_2 = arith.constant 0 : i32
    return %arg0, %c0_i32, %c0_i32_0, %c0_i32_1 : i32, i32, i32, i32
  }
  func.func @transform_3(%arg0: i32) -> (i32, i32, i32, i32) {
    %c0_i32 = arith.constant 0 : i32
    %c0_i32_0 = arith.constant 0 : i32
    %c0_i32_1 = arith.constant 0 : i32
    %c0_i32_2 = arith.constant 0 : i32
    return %arg0, %c0_i32, %c0_i32_0, %c0_i32_1 : i32, i32, i32, i32
  }
  func.func @transform_4(%arg0: i32) -> (i32, i32, i32) {
    %c0_i32 = arith.constant 0 : i32
    %c0_i32_0 = arith.constant 0 : i32
    %c0_i32_1 = arith.constant 0 : i32
    %c0_i32_2 = arith.constant 0 : i32
    return %c0_i32, %c0_i32_0, %c0_i32_1 : i32, i32, i32
  }
  func.func @transform_5(%arg0: i32) -> (i32, i32) {
    %c0_i32 = arith.constant 0 : i32
    %c0_i32_0 = arith.constant 0 : i32
    %c0_i32_1 = arith.constant 0 : i32
    return %c0_i32, %c0_i32_0 : i32, i32
  }
  func.func @transform_6(%arg0: i32) -> (i32, i32, i32) {
    %c0_i32 = arith.constant 0 : i32
    %c0_i32_0 = arith.constant 0 : i32
    %c0_i32_1 = arith.constant 0 : i32
    return %arg0, %c0_i32, %c0_i32_0 : i32, i32, i32
  }
}

</mosaic_0001>

<llo_original>
// kernel: tpu_custom_call.1
$region0: #{tpu_custom_call.1}
  #allocation0 [shape = 'u32[]', space=smem, size = 0x4, offset = 0x4, fixed_abs, tag = 'smem constant byte address 0x4 - core index']
  #allocation1 [shape = 'u32[144,128]{1,0:T(1,128)}', space=vmem, size = 0x12000, scoped, tag = 'internal scratch']
  %s0 = inlined_call_operand.vmem [shape: f32[2,8,256], index: 0, kind: input, shape index: {}]
  %s1 = inlined_call_operand.vmem [shape: f32[2,2,8,1], index: 1, kind: input, shape index: {}]
  %s2 = inlined_call_operand.vmem [shape: f32[2,2,8,1], index: 2, kind: input, shape index: {}]
  %s3 = inlined_call_operand.vmem [shape: f32[2,2,8,1], index: 3, kind: input, shape index: {}]
  %s4 = inlined_call_operand.vmem [shape: bf16[2,8,72], index: 4, kind: input, shape index: {}]
  %s5 = inlined_call_operand.vmem [shape: f32[19,256], index: 5, kind: input, shape index: {}]
  %s6 = inlined_call_operand.hbm [shape: f32[2,8,256], index: 6, kind: output, shape index: {}]
  %s7 = sld [smem:[#allocation0]]
  $region57: #{tpu_custom_call.1} parent=0
    _
  %s9 = ssub.s32 1, %s7
  %s10 = scalar_select 0, %s9, %s7
  $region1: #{tpu_custom_call.1} parent=0
    #allocation2 [shape = 'u8[16384]{0}', space=vmem, size = 0x4000, scoped, tag = 'output window, operand 0']
    #allocation3 [shape = 's32[2]{0}', space=sflag, size = 0x8, scoped, tag = 'scoped memory for tpu_custom_call.1']
    %11 = vsyncpa [#allocation3], 0
    %s12 = scalar_lea.sflag [#allocation3], 1
    %13 = vsyncpa %s12, 0
    loop: start=0, step=1, limit=4
    $region2: #{tpu_custom_call.1} parent=1 // loop_pre_header
      _
    $region3: #{tpu_custom_call.1} parent=1 // loop_header
      %s15 = sphi 0, %s19
      %p16 = scmp.ge.s32.totalorder %s15, 4
      %s25 = sphi 0, %s27
      %s28 = sphi 0, %s25
      %s29 = sphi 0, %s28
      %s45 = sphi 0, %s29
      %s51 = sphi 0, %s53
      %s54 = sphi 0, %s51
      %s55 = sphi 0, %s54
      %s71 = sphi 0, %s55
      %s77 = sphi 0, %s79
      %s80 = sphi 0, %s77
      %s81 = sphi 0, %s80
      %s97 = sphi 0, %s81
      %s103 = sphi 0, %s105
      %s106 = sphi 0, %s103
      %s107 = sphi 0, %s106
      %s123 = sphi 0, %s107
      %s127 = sphi 0, %s127
      %s129 = sphi 0, %s127
      %s130 = sphi 0, %s129
      %s144 = sphi 0, %s130
      %s148 = sphi 0, %s148
      %s150 = sphi 0, %s148
      %s151 = sphi 0, %s150
      %s165 = sphi 0, %s151
      %s171 = sphi 0, %s173
      %s174 = sphi 0, %s171
      %s175 = sphi 0, %s174
      %s191 = sphi 0, %s175
    $region4: #{tpu_custom_call.1} parent=1 // loop_header_branch
      %18 = sbr.rel (%p16) target = $region8
    $region5: #{tpu_custom_call.1} parent=1 // loop_body
      %s20 = ssub.s32 %s15, 1
      %s21 = ssub.s32 %s15, 2
      %s22 = sadd.s32 %s15, 1
      %s23 = ssub.s32 %s15, %s22
      %p24 = scmp.eq.s32.totalorder %s23, 0
      %s26 = sadd.s32 %s25, 1
      %s27 = scalar_select %p24, %s25, %s26
      %p30 = pneg %p24
      %p31 = scmp.eq.s32.totalorder %s15, 1
      %p32 = por %p30, %p31
      %p33 = scmp.ne.s32.totalorder %s25, %s28
      %p34 = scmp.eq.s32.totalorder %s15, 0
      %p35 = por %p33, %p34
      %p36 = scmp.ne.s32.totalorder %s25, %s28
      %p37 = scmp.eq.s32.totalorder %s20, 1
      %p38 = por %p36, %p37
      %p39 = scmp.ne.s32.totalorder %s28, %s29
      %p40 = scmp.eq.s32.totalorder %s20, 0
      %p41 = por %p39, %p40
      %p42 = scmp.ne.s32.totalorder %s28, %s29
      %p43 = scmp.eq.s32.totalorder %s21, 1
      %p44 = por %p42, %p43
      %p46 = scmp.ne.s32.totalorder %s29, %s45
      %p47 = scmp.eq.s32.totalorder %s21, 0
      %p48 = por %p46, %p47
      %s49 = ssub.s32 %s15, %s22
      %p50 = scmp.eq.s32.totalorder %s49, 0
      %s52 = sadd.s32 %s51, 1
      %s53 = scalar_select %p50, %s51, %s52
      %p56 = pneg %p50
      %p57 = scmp.eq.s32.totalorder %s15, 1
      %p58 = por %p56, %p57
      %p59 = scmp.ne.s32.totalorder %s51, %s54
      %p60 = scmp.eq.s32.totalorder %s15, 0
      %p61 = por %p59, %p60
      %p62 = scmp.ne.s32.totalorder %s51, %s54
      %p63 = scmp.eq.s32.totalorder %s20, 1
      %p64 = por %p62, %p63
      %p65 = scmp.ne.s32.totalorder %s54, %s55
      %p66 = scmp.eq.s32.totalorder %s20, 0
      %p67 = por %p65, %p66
      %p68 = scmp.ne.s32.totalorder %s54, %s55
      %p69 = scmp.eq.s32.totalorder %s21, 1
      %p70 = por %p68, %p69
      %p72 = scmp.ne.s32.totalorder %s55, %s71
      %p73 = scmp.eq.s32.totalorder %s21, 0
      %p74 = por %p72, %p73
      %s75 = ssub.s32 %s15, %s22
      %p76 = scmp.eq.s32.totalorder %s75, 0
      %s78 = sadd.s32 %s77, 1
      %s79 = scalar_select %p76, %s77, %s78
      %p82 = pneg %p76
      %p83 = scmp.eq.s32.totalorder %s15, 1
      %p84 = por %p82, %p83
      %p85 = scmp.ne.s32.totalorder %s77, %s80
      %p86 = scmp.eq.s32.totalorder %s15, 0
      %p87 = por %p85, %p86
      %p88 = scmp.ne.s32.totalorder %s77, %s80
      %p89 = scmp.eq.s32.totalorder %s20, 1
      %p90 = por %p88, %p89
      %p91 = scmp.ne.s32.totalorder %s80, %s81
      %p92 = scmp.eq.s32.totalorder %s20, 0
      %p93 = por %p91, %p92
      %p94 = scmp.ne.s32.totalorder %s80, %s81
      %p95 = scmp.eq.s32.totalorder %s21, 1
      %p96 = por %p94, %p95
      %p98 = scmp.ne.s32.totalorder %s81, %s97
      %p99 = scmp.eq.s32.totalorder %s21, 0
      %p100 = por %p98, %p99
      %s101 = ssub.s32 %s15, %s22
      %p102 = scmp.eq.s32.totalorder %s101, 0
      %s104 = sadd.s32 %s103, 1
      %s105 = scalar_select %p102, %s103, %s104
      %p108 = pneg %p102
      %p109 = scmp.eq.s32.totalorder %s15, 1
      %p110 = por %p108, %p109
      %p111 = scmp.ne.s32.totalorder %s103, %s106
      %p112 = scmp.eq.s32.totalorder %s15, 0
      %p113 = por %p111, %p112
      %p114 = scmp.ne.s32.totalorder %s103, %s106
      %p115 = scmp.eq.s32.totalorder %s20, 1
      %p116 = por %p114, %p115
      %p117 = scmp.ne.s32.totalorder %s106, %s107
      %p118 = scmp.eq.s32.totalorder %s20, 0
      %p119 = por %p117, %p118
      %p120 = scmp.ne.s32.totalorder %s106, %s107
      %p121 = scmp.eq.s32.totalorder %s21, 1
      %p122 = por %p120, %p121
      %p124 = scmp.ne.s32.totalorder %s107, %s123
      %p125 = scmp.eq.s32.totalorder %s21, 0
      %p126 = por %p124, %p125
      %s128 = sadd.s32 %s127, 1
      %p131 = scmp.eq.s32.totalorder %s15, 1
      %p132 = scmp.ne.s32.totalorder %s127, %s129
      %p133 = scmp.eq.s32.totalorder %s15, 0
      %p134 = por %p132, %p133
      %p135 = scmp.ne.s32.totalorder %s127, %s129
      %p136 = scmp.eq.s32.totalorder %s20, 1
      %p137 = por %p135, %p136
      %p138 = scmp.ne.s32.totalorder %s129, %s130
      %p139 = scmp.eq.s32.totalorder %s20, 0
      %p140 = por %p138, %p139
      %p141 = scmp.ne.s32.totalorder %s129, %s130
      %p142 = scmp.eq.s32.totalorder %s21, 1
      %p143 = por %p141, %p142
      %p145 = scmp.ne.s32.totalorder %s130, %s144
      %p146 = scmp.eq.s32.totalorder %s21, 0
      %p147 = por %p145, %p146
      %s149 = sadd.s32 %s148, 1
      %p152 = scmp.eq.s32.totalorder %s15, 1
      %p153 = scmp.ne.s32.totalorder %s148, %s150
      %p154 = scmp.eq.s32.totalorder %s15, 0
      %p155 = por %p153, %p154
      %p156 = scmp.ne.s32.totalorder %s148, %s150
      %p157 = scmp.eq.s32.totalorder %s20, 1
      %p158 = por %p156, %p157
      %p159 = scmp.ne.s32.totalorder %s150, %s151
      %p160 = scmp.eq.s32.totalorder %s20, 0
      %p161 = por %p159, %p160
      %p162 = scmp.ne.s32.totalorder %s150, %s151
      %p163 = scmp.eq.s32.totalorder %s21, 1
      %p164 = por %p162, %p163
      %p166 = scmp.ne.s32.totalorder %s151, %s165
      %p167 = scmp.eq.s32.totalorder %s21, 0
      %p168 = por %p166, %p167
      %s169 = ssub.s32 %s15, %s22
      %p170 = scmp.eq.s32.totalorder %s169, 0
      %s172 = sadd.s32 %s171, 1
      %s173 = scalar_select %p170, %s171, %s172
      %p176 = pneg %p170
      %p177 = scmp.eq.s32.totalorder %s15, 1
      %p178 = por %p176, %p177
      %p179 = scmp.ne.s32.totalorder %s171, %s174
      %p180 = scmp.eq.s32.totalorder %s15, 0
      %p181 = por %p179, %p180
      %p182 = scmp.ne.s32.totalorder %s171, %s174
      %p183 = scmp.eq.s32.totalorder %s20, 1
      %p184 = por %p182, %p183
      %p185 = scmp.ne.s32.totalorder %s174, %s175
      %p186 = scmp.eq.s32.totalorder %s20, 0
      %p187 = por %p185, %p186
      %p188 = scmp.ne.s32.totalorder %s174, %s175
      %p189 = scmp.eq.s32.totalorder %s21, 1
      %p190 = por %p188, %p189
      %p192 = scmp.ne.s32.totalorder %s175, %s191
      %p193 = scmp.eq.s32.totalorder %s21, 0
      %p194 = por %p192, %p193
      %p195 = scmp.le.s32.totalorder 1, %s15
      %p196 = scmp.lt.s32.totalorder %s15, 3
      %p197 = pnand %p195, %p196
      %p198 = pneg %p197
      // Predicated region
      $region9: #{tpu_custom_call.1} parent=5 // pred_check
        _
      $region10: #{tpu_custom_call.1} parent=5 // pred_check_branch
        %200 = sbr.rel (%p197) target = $region12
      $region11: #{tpu_custom_call.1} parent=5 // pred_region
        %s201 = ssub.s32 %s15, 1
        // Predicated region
        $region13: #{tpu_custom_call.1} parent=11 // pred_check
          %p202 = pneg %p140
        $region14: #{tpu_custom_call.1} parent=11 // pred_check_branch
          %204 = sbr.rel (%p202) target = $region16
        $region15: #{tpu_custom_call.1} parent=11 // pred_region
          _
        $region16: #{tpu_custom_call.1} parent=11 // pred_fallthru
          _
        // Predicated region
        $region17: #{tpu_custom_call.1} parent=11 // pred_check
          %p205 = pneg %p161
        $region18: #{tpu_custom_call.1} parent=11 // pred_check_branch
          %207 = sbr.rel (%p205) target = $region20
        $region19: #{tpu_custom_call.1} parent=11 // pred_region
          _
        $region20: #{tpu_custom_call.1} parent=11 // pred_fallthru
          _
      $region12: #{tpu_custom_call.1} parent=5 // pred_fallthru
        _
      %p208 = scmp.lt.s32.totalorder %s15, 2
      // Predicated region
      $region21: #{tpu_custom_call.1} parent=5 // pred_check
        %p209 = pneg %p208
      $region22: #{tpu_custom_call.1} parent=5 // pred_check_branch
        %211 = sbr.rel (%p209) target = $region24
      $region23: #{tpu_custom_call.1} parent=5 // pred_region
        // Predicated region
        $region25: #{tpu_custom_call.1} parent=23 // pred_check
          %p212 = pneg %p35
        $region26: #{tpu_custom_call.1} parent=23 // pred_check_branch
          %214 = sbr.rel (%p212) target = $region28
        $region27: #{tpu_custom_call.1} parent=23 // pred_region
          %p215 = scmp.lt.s32.totalorder %s15, 1
          %s216 = scalar_select %p215, %s15, 1
          %s217 = smul.addr %s216, 2
          %s218 = smul.addr %s217, 8
          %s219 = scalar_lea.vmem %s0, %s218
        $region28: #{tpu_custom_call.1} parent=23 // pred_fallthru
          _
        // Predicated region
        $region29: #{tpu_custom_call.1} parent=23 // pred_check
          %p220 = pneg %p61
        $region30: #{tpu_custom_call.1} parent=23 // pred_check_branch
          %222 = sbr.rel (%p220) target = $region32
        $region31: #{tpu_custom_call.1} parent=23 // pred_region
          %p223 = scmp.lt.s32.totalorder %s15, 1
          %s224 = scalar_select %p223, %s15, 1
          %s225 = smul.addr %s224, 2
          %s226 = smul.addr %s225, 8
          %s227 = scalar_lea.vmem %s1, %s226
        $region32: #{tpu_custom_call.1} parent=23 // pred_fallthru
          _
        // Predicated region
        $region33: #{tpu_custom_call.1} parent=23 // pred_check
          %p228 = pneg %p87
        $region34: #{tpu_custom_call.1} parent=23 // pred_check_branch
          %230 = sbr.rel (%p228) target = $region36
        $region35: #{tpu_custom_call.1} parent=23 // pred_region
          %p231 = scmp.lt.s32.totalorder %s15, 1
          %s232 = scalar_select %p231, %s15, 1
          %s233 = smul.addr %s232, 2
          %s234 = smul.addr %s233, 8
          %s235 = scalar_lea.vmem %s2, %s234
        $region36: #{tpu_custom_call.1} parent=23 // pred_fallthru
          _
        // Predicated region
        $region37: #{tpu_custom_call.1} parent=23 // pred_check
          %p236 = pneg %p113
        $region38: #{tpu_custom_call.1} parent=23 // pred_check_branch
          %238 = sbr.rel (%p236) target = $region40
        $region39: #{tpu_custom_call.1} parent=23 // pred_region
          %p239 = scmp.lt.s32.totalorder %s15, 1
          %s240 = scalar_select %p239, %s15, 1
          %s241 = smul.addr %s240, 2
          %s242 = smul.addr %s241, 8
          %s243 = scalar_lea.vmem %s3, %s242
        $region40: #{tpu_custom_call.1} parent=23 // pred_fallthru
          _
      $region24: #{tpu_custom_call.1} parent=5 // pred_fallthru
        _
      %p244 = scmp.le.s32.totalorder 1, %s15
      %p245 = scmp.lt.s32.totalorder %s15, 3
      %p246 = pnand %p244, %p245
      %p247 = pneg %p246
      // Predicated region
      $region41: #{tpu_custom_call.1} parent=5 // pred_check
        _
      $region42: #{tpu_custom_call.1} parent=5 // pred_check_branch
        %249 = sbr.rel (%p246) target = $region44
      $region43: #{tpu_custom_call.1} parent=5 // pred_region
        %s250 = ssub.s32 %s15, 1
        %p251 = scmp.lt.s32.totalorder %s20, 1
        %s252 = scalar_select %p251, %s20, 1
        %s253 = smul.addr %s252, 2
        %s254 = smul.addr %s253, 8
        %s255 = scalar_lea.vmem %s0, %s254
        %p256 = pneg %p41
        %p257 = pneg %p38
        %p258 = scmp.lt.s32.totalorder %s20, 1
        %s259 = scalar_select %p258, %s20, 1
        %s260 = smul.addr %s259, 2
        %s261 = smul.addr %s260, 8
        %s262 = scalar_lea.vmem %s1, %s261
        %p263 = pneg %p67
        %p264 = pneg %p64
        %p265 = scmp.lt.s32.totalorder %s20, 1
        %s266 = scalar_select %p265, %s20, 1
        %s267 = smul.addr %s266, 2
        %s268 = smul.addr %s267, 8
        %s269 = scalar_lea.vmem %s2, %s268
        %p270 = pneg %p93
        %p271 = pneg %p90
        %p272 = scmp.lt.s32.totalorder %s20, 1
        %s273 = scalar_select %p272, %s20, 1
        %s274 = smul.addr %s273, 2
        %s275 = smul.addr %s274, 8
        %s276 = scalar_lea.vmem %s3, %s275
        %p277 = pneg %p119
        %p278 = pneg %p116
        %p279 = pneg %p140
        %p280 = pneg %p137
        %p281 = pneg %p161
        %p282 = pneg %p158
        %p283 = pneg %p187
        %p284 = pneg %p184
        %s285 = sand.u32 %s174, 1
        %s286 = scalar_lea.sflag [#allocation3], %s285
        %s287 = sand.u32 %s174, 1
        %s288 = smul.addr %s287, 16
        %s289 = scalar_lea.vmem [#allocation2], %s288
        %p290 = scmp.lt.s32.totalorder %s20, 1
        %s291 = scalar_select %p290, %s20, 1
        %s292 = smul.addr %s291, 2
        %s293 = smul.addr %s292, 8
        %s294 = scalar_lea.vmem %s0, %s293
        %p295 = scmp.lt.s32.totalorder %s20, 1
        %s296 = scalar_select %p295, %s20, 1
        %s297 = smul.addr %s296, 2
        %s298 = smul.addr %s297, 8
        %s299 = scalar_lea.vmem %s1, %s298
        %p300 = scmp.lt.s32.totalorder %s20, 1
        %s301 = scalar_select %p300, %s20, 1
        %s302 = smul.addr %s301, 2
        %s303 = smul.addr %s302, 8
        %s304 = scalar_lea.vmem %s2, %s303
        %p305 = scmp.lt.s32.totalorder %s20, 1
        %s306 = scalar_select %p305, %s20, 1
        %s307 = smul.addr %s306, 2
        %s308 = smul.addr %s307, 8
        %s309 = scalar_lea.vmem %s3, %s308
        %v311 = vld [vmem:[%s5] ss:$8 sm:$0x3]
        %s312 = scalar_lea.vmem %s5, 1
        %v313 = vld [vmem:[%s312] ss:$8 sm:$0x3]
        %s314 = scalar_lea.vmem %s5, 3
        %v315 = vld [vmem:[%s314] ss:$8 sm:$0x3]
        %s316 = scalar_lea.vmem %s5, 4
        %v317 = vld [vmem:[%s316] ss:$8 sm:$0x3]
        %s318 = scalar_lea.vmem %s5, 5
        %v319 = vld [vmem:[%s318] ss:$8 sm:$0x3]
        %s320 = scalar_lea.vmem %s5, 6
        %v321 = vld [vmem:[%s320] ss:$8 sm:$0x3]
        %s322 = scalar_lea.vmem %s5, 16
        %v323 = vld [vmem:[%s322] ss:$8 sm:$0x3]
        %s324 = scalar_lea.vmem %s5, 17
        %v325 = vld [vmem:[%s324] ss:$8 sm:$0x3]
        %s326 = scalar_lea.vmem %s5, 18
        %v327 = vld [vmem:[%s326] ss:$8 sm:$0x3]
        %s328 = scalar_lea.vmem %s5, 19
        %v329 = vld [vmem:[%s328] ss:$8 sm:$0x3]
        %s330 = scalar_lea.vmem %s5, 20
        %v331 = vld [vmem:[%s330] ss:$8 sm:$0x3]
        %s332 = scalar_lea.vmem %s5, 21
        %v333 = vld [vmem:[%s332] ss:$8 sm:$0x3]
        %s334 = scalar_lea.vmem %s5, 23
        %v335 = vld [vmem:[%s334] ss:$8 sm:$0x3]
        %s336 = scalar_lea.vmem %s5, 32
        %v337 = vld [vmem:[%s336] ss:$8 sm:$0x3]
        %s338 = scalar_lea.vmem %s5, 33
        %v339 = vld [vmem:[%s338] ss:$8 sm:$0x3]
        %s340 = scalar_lea.vmem %s5, 34
        %v341 = vld [vmem:[%s340] ss:$8 sm:$0x3]
        %v342 = vld [vmem:[%s294] sm:$0xff]
        %v343 = vld [vmem:[%s294 + $0x8] sm:$0xff]
        %v344 = vmax.f32 %v342, 0.0
        %v345 = vmax.f32 %v343, 0.0
        %v346 = vld [vmem:[%s299] sm:$0xff]
        %v347 = vld [vmem:[%s304] sm:$0xff]
        %v348 = vld [vmem:[%s309] sm:$0xff]
        %v349 = vadd.f32 %v344, %v345
        %350 = vadd.xlane.f32.xlu0 %v349
        %v351 = vpop.xlane.xlu0 %350
        %v352 = vrcp.pop 256.0
        %v353 = vmul.f32 %v351, %v352
        %v354 = vmul.f32 %v344, %v344
        %v355 = vmul.f32 %v345, %v345
        %v356 = vadd.f32 %v354, %v355
        %357 = vadd.xlane.f32.xlu0 %v356
        %v358 = vpop.xlane.xlu0 %357
        %v359 = vmul.f32 %v358, %v352
        %v360 = vmul.f32 %v353, %v353
        %v361 = vsub.f32 %v359, %v360
        %v362 = vadd.f32 %v361, 1e-05
        %v363 = vrsqrt.pop %v362
        %v364 = vrot.slane %v353, 4
        %v365 = vadd.f32 %v353, %v364
        %v366 = vrot.slane %v365, 2
        %v367 = vadd.f32 %v365, %v366
        %v368 = vrot.slane %v367, 1
        %v369 = vadd.f32 %v367, %v368
        %v370 = vrcp.pop 8.0
        %v371 = vmul.f32 %v369, %v370
        %v372 = vsub.f32 %v353, %v371
        %v373 = vmul.f32 %v372, %v372
        %v374 = vrot.slane %v373, 4
        %v375 = vadd.f32 %v373, %v374
        %v376 = vrot.slane %v375, 2
        %v377 = vadd.f32 %v375, %v376
        %v378 = vrot.slane %v377, 1
        %v379 = vadd.f32 %v377, %v378
        %v380 = vmul.f32 %v379, 0.14285715
        %v381 = vadd.f32 %v380, 1e-05
        %v382 = vrsqrt.pop %v381
        %v383 = vmul.f32 %v372, %v382
        %v384 = vmul.f32 %v346, %v363
        %v385 = vmul.f32 %v383, %v347
        %v386 = vmul.f32 %v353, %v363
        %v387 = vsub.f32 %v385, %v386
        %v388 = vmul.f32 %v346, %v387
        %v389 = vadd.f32 %v388, %v348
        %391 = vset.pattern.permute.xlu0 0
        %392 = vperm.xlu0 %391, %v384
        %v393 = vpop.permute.xlu0 %392
        %v395 = vmul.f32 %v344, %v393
        %v396 = vmul.f32 %v345, %v393
        %398 = vset.pattern.permute.xlu0 0
        %399 = vperm.xlu0 %398, %v389
        %v400 = vpop.permute.xlu0 %399
        %v402 = vadd.f32 %v395, %v400
        %v403 = vadd.f32 %v396, %v400
        %404 = vrot.lane.b32.xlu0 %v402, 2
        %v405 = vpop.permute.xlu0 %404
        %406 = vrot.lane.b32.xlu0 %v403, 2
        %v407 = vpop.permute.xlu0 %406
        %v408 = vlaneseq
        %v409 = vand.u32 %v408, 127
        %vm410 = vcmp.lt.s32.totalorder %v409, 2
        %v411 = vsel %vm410, %v405, %v407
        %v412 = vsel %vm410, %v407, %v405
        %v414 = vlaneseq
        %v415 = vshrl.u32 %v414, 7
        %v416 = vsub.s32 0, %v415
        %v417 = vrot.slane %v311, %v416
        %v418 = vlaneseq
        %v419 = vshrl.u32 %v418, 7
        %v420 = vsub.s32 1, %v419
        %v421 = vrot.slane %v311, %v420
        %v424 = vmul.f32 %v417, %v412
        %v425 = vmul.f32 %v421, %v411
        %v426 = vadd.f32 %v402, %v424
        %v427 = vadd.f32 %v403, %v425
        %428 = vrot.lane.b32.xlu0 %v402, 1
        %v429 = vpop.permute.xlu0 %428
        %430 = vrot.lane.b32.xlu0 %v403, 1
        %v431 = vpop.permute.xlu0 %430
        %vm432 = vcmp.lt.s32.totalorder %v409, 1
        %v433 = vsel %vm432, %v429, %v431
        %v434 = vsel %vm432, %v431, %v429
        %v436 = vlaneseq
        %v437 = vshrl.u32 %v436, 7
        %v438 = vsub.s32 0, %v437
        %v439 = vrot.slane %v313, %v438
        %v440 = vlaneseq
        %v441 = vshrl.u32 %v440, 7
        %v442 = vsub.s32 1, %v441
        %v443 = vrot.slane %v313, %v442
        %v446 = vmul.f32 %v439, %v434
        %v447 = vmul.f32 %v443, %v433
        %v448 = vadd.f32 %v426, %v446
        %v449 = vadd.f32 %v427, %v447
        %450 = vrot.lane.b32.xlu0 %v402, 127
        %v451 = vpop.permute.xlu0 %450
        %452 = vrot.lane.b32.xlu0 %v403, 127
        %v453 = vpop.permute.xlu0 %452
        %vm454 = vcmp.lt.s32.totalorder %v409, 127
        %v455 = vsel %vm454, %v451, %v453
        %v456 = vsel %vm454, %v453, %v451
        %v458 = vlaneseq
        %v459 = vshrl.u32 %v458, 7
        %v460 = vsub.s32 0, %v459
        %v461 = vrot.slane %v315, %v460
        %v462 = vlaneseq
        %v463 = vshrl.u32 %v462, 7
        %v464 = vsub.s32 1, %v463
        %v465 = vrot.slane %v315, %v464
        %v468 = vmul.f32 %v461, %v455
        %v469 = vmul.f32 %v465, %v456
        %v470 = vadd.f32 %v448, %v468
        %v471 = vadd.f32 %v449, %v469
        %472 = vrot.lane.b32.xlu0 %v402, 126
        %v473 = vpop.permute.xlu0 %472
        %474 = vrot.lane.b32.xlu0 %v403, 126
        %v475 = vpop.permute.xlu0 %474
        %vm476 = vcmp.lt.s32.totalorder %v409, 126
        %v477 = vsel %vm476, %v473, %v475
        %v478 = vsel %vm476, %v475, %v473
        %v480 = vlaneseq
        %v481 = vshrl.u32 %v480, 7
        %v482 = vsub.s32 0, %v481
        %v483 = vrot.slane %v317, %v482
        %v484 = vlaneseq
        %v485 = vshrl.u32 %v484, 7
        %v486 = vsub.s32 1, %v485
        %v487 = vrot.slane %v317, %v486
        %v490 = vmul.f32 %v483, %v477
        %v491 = vmul.f32 %v487, %v478
        %v492 = vadd.f32 %v470, %v490
        %v493 = vadd.f32 %v471, %v491
        %494 = vrot.lane.b32.xlu0 %v492, 32
        %v495 = vpop.permute.xlu0 %494
        %496 = vrot.lane.b32.xlu0 %v493, 32
        %v497 = vpop.permute.xlu0 %496
        %vm498 = vcmp.lt.s32.totalorder %v409, 32
        %v499 = vsel %vm498, %v495, %v497
        %v500 = vsel %vm498, %v497, %v495
        %v502 = vlaneseq
        %v503 = vshrl.u32 %v502, 7
        %v504 = vsub.s32 0, %v503
        %v505 = vrot.slane %v319, %v504
        %v506 = vlaneseq
        %v507 = vshrl.u32 %v506, 7
        %v508 = vsub.s32 1, %v507
        %v509 = vrot.slane %v319, %v508
        %v512 = vmul.f32 %v505, %v500
        %v513 = vmul.f32 %v509, %v499
        %v514 = vadd.f32 %v492, %v512
        %v515 = vadd.f32 %v493, %v513
        %516 = vrot.lane.b32.xlu0 %v492, 16
        %v517 = vpop.permute.xlu0 %516
        %518 = vrot.lane.b32.xlu0 %v493, 16
        %v519 = vpop.permute.xlu0 %518
        %vm520 = vcmp.lt.s32.totalorder %v409, 16
        %v521 = vsel %vm520, %v517, %v519
        %v522 = vsel %vm520, %v519, %v517
        %v524 = vlaneseq
        %v525 = vshrl.u32 %v524, 7
        %v526 = vsub.s32 0, %v525
        %v527 = vrot.slane %v321, %v526
        %v528 = vlaneseq
        %v529 = vshrl.u32 %v528, 7
        %v530 = vsub.s32 1, %v529
        %v531 = vrot.slane %v321, %v530
        %v534 = vmul.f32 %v527, %v522
        %v535 = vmul.f32 %v531, %v521
        %v536 = vadd.f32 %v514, %v534
        %v537 = vadd.f32 %v515, %v535
        %538 = vrot.lane.b32.xlu0 %v492, 112
        %v539 = vpop.permute.xlu0 %538
        %540 = vrot.lane.b32.xlu0 %v493, 112
        %v541 = vpop.permute.xlu0 %540
        %vm542 = vcmp.lt.s32.totalorder %v409, 112
        %v543 = vsel %vm542, %v539, %v541
        %v544 = vsel %vm542, %v541, %v539
        %v546 = vlaneseq
        %v547 = vshrl.u32 %v546, 7
        %v548 = vsub.s32 0, %v547
        %v549 = vrot.slane %v323, %v548
        %v550 = vlaneseq
        %v551 = vshrl.u32 %v550, 7
        %v552 = vsub.s32 1, %v551
        %v553 = vrot.slane %v323, %v552
        %v556 = vmul.f32 %v549, %v543
        %v557 = vmul.f32 %v553, %v544
        %v558 = vadd.f32 %v536, %v556
        %v559 = vadd.f32 %v537, %v557
        %560 = vrot.lane.b32.xlu0 %v492, 96
        %v561 = vpop.permute.xlu0 %560
        %562 = vrot.lane.b32.xlu0 %v493, 96
        %v563 = vpop.permute.xlu0 %562
        %vm564 = vcmp.lt.s32.totalorder %v409, 96
        %v565 = vsel %vm564, %v561, %v563
        %v566 = vsel %vm564, %v563, %v561
        %v568 = vlaneseq
        %v569 = vshrl.u32 %v568, 7
        %v570 = vsub.s32 0, %v569
        %v571 = vrot.slane %v325, %v570
        %v572 = vlaneseq
        %v573 = vshrl.u32 %v572, 7
        %v574 = vsub.s32 1, %v573
        %v575 = vrot.slane %v325, %v574
        %v578 = vmul.f32 %v571, %v565
        %v579 = vmul.f32 %v575, %v566
        %v580 = vadd.f32 %v558, %v578
        %v581 = vadd.f32 %v559, %v579
        %v582 = vmul.f32 %v580, 0.04
        %v583 = vmul.f32 %v581, 0.04
        %584 = vrot.lane.b32.xlu0 %v582, 17
        %v585 = vpop.permute.xlu0 %584
        %586 = vrot.lane.b32.xlu0 %v583, 17
        %v587 = vpop.permute.xlu0 %586
        %vm588 = vcmp.lt.s32.totalorder %v409, 17
        %v589 = vsel %vm588, %v585, %v587
        %v590 = vsel %vm588, %v587, %v585
        %v592 = vlaneseq
        %v593 = vshrl.u32 %v592, 7
        %v594 = vsub.s32 0, %v593
        %v595 = vrot.slane %v327, %v594
        %v596 = vlaneseq
        %v597 = vshrl.u32 %v596, 7
        %v598 = vsub.s32 1, %v597
        %v599 = vrot.slane %v327, %v598
        %v602 = vmul.f32 %v595, %v590
        %v603 = vmul.f32 %v599, %v589
        %604 = vrot.lane.b32.xlu0 %v582, 16
        %v605 = vpop.permute.xlu0 %604
        %606 = vrot.lane.b32.xlu0 %v583, 16
        %v607 = vpop.permute.xlu0 %606
        %v608 = vsel %vm520, %v605, %v607
        %v609 = vsel %vm520, %v607, %v605
        %v611 = vlaneseq
        %v612 = vshrl.u32 %v611, 7
        %v613 = vsub.s32 0, %v612
        %v614 = vrot.slane %v329, %v613
        %v615 = vlaneseq
        %v616 = vshrl.u32 %v615, 7
        %v617 = vsub.s32 1, %v616
        %v618 = vrot.slane %v329, %v617
        %v621 = vmul.f32 %v614, %v609
        %v622 = vmul.f32 %v618, %v608
        %623 = vrot.lane.b32.xlu0 %v582, 15
        %v624 = vpop.permute.xlu0 %623
        %625 = vrot.lane.b32.xlu0 %v583, 15
        %v626 = vpop.permute.xlu0 %625
        %vm627 = vcmp.lt.s32.totalorder %v409, 15
        %v628 = vsel %vm627, %v624, %v626
        %v629 = vsel %vm627, %v626, %v624
        %v631 = vlaneseq
        %v632 = vshrl.u32 %v631, 7
        %v633 = vsub.s32 0, %v632
        %v634 = vrot.slane %v331, %v633
        %v635 = vlaneseq
        %v636 = vshrl.u32 %v635, 7
        %v637 = vsub.s32 1, %v636
        %v638 = vrot.slane %v331, %v637
        %v641 = vmul.f32 %v634, %v629
        %v642 = vmul.f32 %v638, %v628
        %643 = vrot.lane.b32.xlu0 %v582, 1
        %v644 = vpop.permute.xlu0 %643
        %645 = vrot.lane.b32.xlu0 %v583, 1
        %v646 = vpop.permute.xlu0 %645
        %v647 = vsel %vm432, %v644, %v646
        %v648 = vsel %vm432, %v646, %v644
        %v650 = vlaneseq
        %v651 = vshrl.u32 %v650, 7
        %v652 = vsub.s32 0, %v651
        %v653 = vrot.slane %v333, %v652
        %v654 = vlaneseq
        %v655 = vshrl.u32 %v654, 7
        %v656 = vsub.s32 1, %v655
        %v657 = vrot.slane %v333, %v656
        %v660 = vmul.f32 %v653, %v648
        %v661 = vmul.f32 %v657, %v647
        %662 = vrot.lane.b32.xlu0 %v582, 127
        %v663 = vpop.permute.xlu0 %662
        %664 = vrot.lane.b32.xlu0 %v583, 127
        %v665 = vpop.permute.xlu0 %664
        %v666 = vsel %vm454, %v663, %v665
        %v667 = vsel %vm454, %v665, %v663
        %v669 = vlaneseq
        %v670 = vshrl.u32 %v669, 7
        %v671 = vsub.s32 0, %v670
        %v672 = vrot.slane %v335, %v671
        %v673 = vlaneseq
        %v674 = vshrl.u32 %v673, 7
        %v675 = vsub.s32 1, %v674
        %v676 = vrot.slane %v335, %v675
        %v679 = vmul.f32 %v672, %v666
        %v680 = vmul.f32 %v676, %v667
        %681 = vrot.lane.b32.xlu0 %v582, 113
        %v682 = vpop.permute.xlu0 %681
        %683 = vrot.lane.b32.xlu0 %v583, 113
        %v684 = vpop.permute.xlu0 %683
        %vm685 = vcmp.lt.s32.totalorder %v409, 113
        %v686 = vsel %vm685, %v682, %v684
        %v687 = vsel %vm685, %v684, %v682
        %v689 = vlaneseq
        %v690 = vshrl.u32 %v689, 7
        %v691 = vsub.s32 0, %v690
        %v692 = vrot.slane %v337, %v691
        %v693 = vlaneseq
        %v694 = vshrl.u32 %v693, 7
        %v695 = vsub.s32 1, %v694
        %v696 = vrot.slane %v337, %v695
        %v699 = vmul.f32 %v692, %v686
        %v700 = vmul.f32 %v696, %v687
        %701 = vrot.lane.b32.xlu0 %v582, 112
        %v702 = vpop.permute.xlu0 %701
        %703 = vrot.lane.b32.xlu0 %v583, 112
        %v704 = vpop.permute.xlu0 %703
        %v705 = vsel %vm542, %v702, %v704
        %v706 = vsel %vm542, %v704, %v702
        %v708 = vlaneseq
        %v709 = vshrl.u32 %v708, 7
        %v710 = vsub.s32 0, %v709
        %v711 = vrot.slane %v339, %v710
        %v712 = vlaneseq
        %v713 = vshrl.u32 %v712, 7
        %v714 = vsub.s32 1, %v713
        %v715 = vrot.slane %v339, %v714
        %v718 = vmul.f32 %v711, %v705
        %v719 = vmul.f32 %v715, %v706
        %720 = vrot.lane.b32.xlu0 %v582, 111
        %v721 = vpop.permute.xlu0 %720
        %722 = vrot.lane.b32.xlu0 %v583, 111
        %v723 = vpop.permute.xlu0 %722
        %vm724 = vcmp.lt.s32.totalorder %v409, 111
        %v725 = vsel %vm724, %v721, %v723
        %v726 = vsel %vm724, %v723, %v721
        %v728 = vlaneseq
        %v729 = vshrl.u32 %v728, 7
        %v730 = vsub.s32 0, %v729
        %v731 = vrot.slane %v341, %v730
        %v732 = vlaneseq
        %v733 = vshrl.u32 %v732, 7
        %v734 = vsub.s32 1, %v733
        %v735 = vrot.slane %v341, %v734
        %v738 = vmul.f32 %v731, %v725
        %v739 = vmul.f32 %v735, %v726
        %v740 = vpack.c.bf16 %v621, %v602
        %v741 = vpack.c.bf16 %v622, %v603
        %v742 = vpack.c.bf16 %v660, %v641
        %v743 = vpack.c.bf16 %v661, %v642
        %v744 = vpack.c.bf16 %v679, %v582
        %v745 = vpack.c.bf16 %v680, %v583
        %v746 = vpack.c.bf16 %v718, %v699
        %v747 = vpack.c.bf16 %v719, %v700
        %v748 = vpack.c.bf16 %v738, %v738
        %v749 = vpack.c.bf16 %v739, %v739
        %v750 = vld [vmem:[%s4] sm:$0xf]
        %vm751 = vcmask 588800
        %v753 = vsel %vm751, %v750, 0
        %vm755 = vcmask 1043456
        %v757 = vsel %vm755, %v748, 0
        %v760 = vsel %vm755, %v749, 0
        %762 = vmatprep.subr.bf16.mxu0 0
        %763 = vmatpush1.bf16.msra.mxu0 0
        %764 = vmatprep.subr.bf16.mxu0 0
        %765 = vmatpush1.bf16.msra.mxu0 0
        %766 = vmatprep.subr.bf16.mxu0 0
        %767 = vmatpush1.bf16.msra.mxu0 0
        %768 = vmatprep.subr.bf16.mxu0 %v760
        %769 = vmatpush1.bf16.msra.mxu0 %v757
        %770 = vmatprep.subr.bf16.mxu0 %v747
        %771 = vmatpush1.bf16.msra.mxu0 %v746
        %772 = vmatprep.subr.bf16.mxu0 %v745
        %773 = vmatpush1.bf16.msra.mxu0 %v744
        %774 = vmatprep.subr.bf16.mxu0 %v743
        %775 = vmatpush1.bf16.msra.mxu0 %v742
        %776 = vmatprep.subr.bf16.mxu0 %v741
        %777 = vmatpush1.bf16.msra.mxu0 %v740
        %778 = vmatprep.subr.bf16.mxu0 0
        %779 = vmatpush2.bf16.msra.mxu0 0
        %780 = vmatprep.subr.bf16.mxu0 0
        %781 = vmatpush2.bf16.msra.mxu0 0
        %782 = vmatprep.subr.bf16.mxu0 0
        %783 = vmatpush2.bf16.msra.mxu0 0
        %784 = vmatprep.subr.bf16.mxu0 0
        %785 = vmatpush2.bf16.msra.mxu0 0
        %786 = vmatprep.subr.bf16.mxu0 0
        %787 = vmatpush2.bf16.msra.mxu0 0
        %788 = vmatprep.subr.bf16.mxu0 0
        %789 = vmatpush2.bf16.msra.mxu0 0
        %790 = vmatprep.subr.bf16.mxu0 0
        %791 = vmatpush2.bf16.msra.mxu0 0
        %792 = vmatprep.subr.bf16.mxu0 0
        %793 = vmatpush2.bf16.msra.mxu0 0
        %794 = vmatprep.mubr.bf16.mxu0 0
        %795 = vmatmul.mubr.bf16.gmra.mxu0 %v753
        %v796 = vpop.f32.mrf.mxu0
        %v797 = vadd.f32 0.0, %v796
        %v798 = vpop.f32.mrf.mxu0
        %v799 = vadd.f32 0.0, %v798
        %v800 = vpop.f32.mrf.mxu0
        %v801 = vpop.f32.mrf.mxu0
        %802 = vdwg.mxu0
        %v803 = vadd.f32 %v344, %v797
        %v804 = vadd.f32 %v345, %v799
        %s805 = scalar_lea.vmem %s299, 8
        %v806 = vld [vmem:[%s805] sm:$0xff]
        %s807 = scalar_lea.vmem %s304, 8
        %v808 = vld [vmem:[%s807] sm:$0xff]
        %s809 = scalar_lea.vmem %s309, 8
        %v810 = vld [vmem:[%s809] sm:$0xff]
        %v811 = vadd.f32 %v797, %v799
        %812 = vadd.xlane.f32.xlu0 %v811
        %v813 = vpop.xlane.xlu0 %812
        %v814 = vmul.f32 %v813, %v352
        %v815 = vmul.f32 %v797, %v797
        %v816 = vmul.f32 %v799, %v799
        %v817 = vadd.f32 %v815, %v816
        %818 = vadd.xlane.f32.xlu0 %v817
        %v819 = vpop.xlane.xlu0 %818
        %v820 = vmul.f32 %v819, %v352
        %v821 = vmul.f32 %v814, %v814
        %v822 = vsub.f32 %v820, %v821
        %v823 = vadd.f32 %v822, 1e-05
        %v824 = vrsqrt.pop %v823
        %v825 = vrot.slane %v814, 4
        %v826 = vadd.f32 %v814, %v825
        %v827 = vrot.slane %v826, 2
        %v828 = vadd.f32 %v826, %v827
        %v829 = vrot.slane %v828, 1
        %v830 = vadd.f32 %v828, %v829
        %v831 = vmul.f32 %v830, %v370
        %v832 = vsub.f32 %v814, %v831
        %v833 = vmul.f32 %v832, %v832
        %v834 = vrot.slane %v833, 4
        %v835 = vadd.f32 %v833, %v834
        %v836 = vrot.slane %v835, 2
        %v837 = vadd.f32 %v835, %v836
        %v838 = vrot.slane %v837, 1
        %v839 = vadd.f32 %v837, %v838
        %v840 = vmul.f32 %v839, 0.14285715
        %v841 = vadd.f32 %v840, 1e-05
        %v842 = vrsqrt.pop %v841
        %v843 = vmul.f32 %v832, %v842
        %v844 = vmul.f32 %v806, %v824
        %v845 = vmul.f32 %v843, %v808
        %v846 = vmul.f32 %v814, %v824
        %v847 = vsub.f32 %v845, %v846
        %v848 = vmul.f32 %v806, %v847
        %v849 = vadd.f32 %v848, %v810
        %851 = vset.pattern.permute.xlu0 0
        %852 = vperm.xlu0 %851, %v844
        %v853 = vpop.permute.xlu0 %852
        %v855 = vmul.f32 %v797, %v853
        %v856 = vmul.f32 %v799, %v853
        %858 = vset.pattern.permute.xlu0 0
        %859 = vperm.xlu0 %858, %v849
        %v860 = vpop.permute.xlu0 %859
        %v862 = vadd.f32 %v855, %v860
        %v863 = vadd.f32 %v856, %v860
        %864 = vrot.lane.b32.xlu0 %v862, 2
        %v865 = vpop.permute.xlu0 %864
        %866 = vrot.lane.b32.xlu0 %v863, 2
        %v867 = vpop.permute.xlu0 %866
        %v868 = vsel %vm410, %v865, %v867
        %v869 = vsel %vm410, %v867, %v865
        %v870 = vmul.f32 %v417, %v869
        %v871 = vmul.f32 %v421, %v868
        %v872 = vadd.f32 %v862, %v870
        %v873 = vadd.f32 %v863, %v871
        %874 = vrot.lane.b32.xlu0 %v862, 1
        %v875 = vpop.permute.xlu0 %874
        %876 = vrot.lane.b32.xlu0 %v863, 1
        %v877 = vpop.permute.xlu0 %876
        %v878 = vsel %vm432, %v875, %v877
        %v879 = vsel %vm432, %v877, %v875
        %v880 = vmul.f32 %v439, %v879
        %v881 = vmul.f32 %v443, %v878
        %v882 = vadd.f32 %v872, %v880
        %v883 = vadd.f32 %v873, %v881
        %884 = vrot.lane.b32.xlu0 %v862, 127
        %v885 = vpop.permute.xlu0 %884
        %886 = vrot.lane.b32.xlu0 %v863, 127
        %v887 = vpop.permute.xlu0 %886
        %v888 = vsel %vm454, %v885, %v887
        %v889 = vsel %vm454, %v887, %v885
        %v890 = vmul.f32 %v461, %v888
        %v891 = vmul.f32 %v465, %v889
        %v892 = vadd.f32 %v882, %v890
        %v893 = vadd.f32 %v883, %v891
        %894 = vrot.lane.b32.xlu0 %v862, 126
        %v895 = vpop.permute.xlu0 %894
        %896 = vrot.lane.b32.xlu0 %v863, 126
        %v897 = vpop.permute.xlu0 %896
        %v898 = vsel %vm476, %v895, %v897
        %v899 = vsel %vm476, %v897, %v895
        %v900 = vmul.f32 %v483, %v898
        %v901 = vmul.f32 %v487, %v899
        %v902 = vadd.f32 %v892, %v900
        %v903 = vadd.f32 %v893, %v901
        %904 = vrot.lane.b32.xlu0 %v902, 32
        %v905 = vpop.permute.xlu0 %904
        %906 = vrot.lane.b32.xlu0 %v903, 32
        %v907 = vpop.permute.xlu0 %906
        %v908 = vsel %vm498, %v905, %v907
        %v909 = vsel %vm498, %v907, %v905
        %v910 = vmul.f32 %v505, %v909
        %v911 = vmul.f32 %v509, %v908
        %v912 = vadd.f32 %v902, %v910
        %v913 = vadd.f32 %v903, %v911
        %914 = vrot.lane.b32.xlu0 %v902, 16
        %v915 = vpop.permute.xlu0 %914
        %916 = vrot.lane.b32.xlu0 %v903, 16
        %v917 = vpop.permute.xlu0 %916
        %v918 = vsel %vm520, %v915, %v917
        %v919 = vsel %vm520, %v917, %v915
        %v920 = vmul.f32 %v527, %v919
        %v921 = vmul.f32 %v531, %v918
        %v922 = vadd.f32 %v912, %v920
        %v923 = vadd.f32 %v913, %v921
        %924 = vrot.lane.b32.xlu0 %v902, 112
        %v925 = vpop.permute.xlu0 %924
        %926 = vrot.lane.b32.xlu0 %v903, 112
        %v927 = vpop.permute.xlu0 %926
        %v928 = vsel %vm542, %v925, %v927
        %v929 = vsel %vm542, %v927, %v925
        %v930 = vmul.f32 %v549, %v928
        %v931 = vmul.f32 %v553, %v929
        %v932 = vadd.f32 %v922, %v930
        %v933 = vadd.f32 %v923, %v931
        %934 = vrot.lane.b32.xlu0 %v902, 96
        %v935 = vpop.permute.xlu0 %934
        %936 = vrot.lane.b32.xlu0 %v903, 96
        %v937 = vpop.permute.xlu0 %936
        %v938 = vsel %vm564, %v935, %v937
        %v939 = vsel %vm564, %v937, %v935
        %v940 = vmul.f32 %v571, %v938
        %v941 = vmul.f32 %v575, %v939
        %v942 = vadd.f32 %v932, %v940
        %v943 = vadd.f32 %v933, %v941
        %v944 = vmul.f32 %v942, 0.04
        %v945 = vmul.f32 %v943, 0.04
        %946 = vrot.lane.b32.xlu0 %v944, 17
        %v947 = vpop.permute.xlu0 %946
        %948 = vrot.lane.b32.xlu0 %v945, 17
        %v949 = vpop.permute.xlu0 %948
        %v950 = vsel %vm588, %v947, %v949
        %v951 = vsel %vm588, %v949, %v947
        %v952 = vmul.f32 %v595, %v951
        %v953 = vmul.f32 %v599, %v950
        %954 = vrot.lane.b32.xlu0 %v944, 16
        %v955 = vpop.permute.xlu0 %954
        %956 = vrot.lane.b32.xlu0 %v945, 16
        %v957 = vpop.permute.xlu0 %956
        %v958 = vsel %vm520, %v955, %v957
        %v959 = vsel %vm520, %v957, %v955
        %v960 = vmul.f32 %v614, %v959
        %v961 = vmul.f32 %v618, %v958
        %962 = vrot.lane.b32.xlu0 %v944, 15
        %v963 = vpop.permute.xlu0 %962
        %964 = vrot.lane.b32.xlu0 %v945, 15
        %v965 = vpop.permute.xlu0 %964
        %v966 = vsel %vm627, %v963, %v965
        %v967 = vsel %vm627, %v965, %v963
        %v968 = vmul.f32 %v634, %v967
        %v969 = vmul.f32 %v638, %v966
        %970 = vrot.lane.b32.xlu0 %v944, 1
        %v971 = vpop.permute.xlu0 %970
        %972 = vrot.lane.b32.xlu0 %v945, 1
        %v973 = vpop.permute.xlu0 %972
        %v974 = vsel %vm432, %v971, %v973
        %v975 = vsel %vm432, %v973, %v971
        %v976 = vmul.f32 %v653, %v975
        %v977 = vmul.f32 %v657, %v974
        %978 = vrot.lane.b32.xlu0 %v944, 127
        %v979 = vpop.permute.xlu0 %978
        %980 = vrot.lane.b32.xlu0 %v945, 127
        %v981 = vpop.permute.xlu0 %980
        %v982 = vsel %vm454, %v979, %v981
        %v983 = vsel %vm454, %v981, %v979
        %v984 = vmul.f32 %v672, %v982
        %v985 = vmul.f32 %v676, %v983
        %986 = vrot.lane.b32.xlu0 %v944, 113
        %v987 = vpop.permute.xlu0 %986
        %988 = vrot.lane.b32.xlu0 %v945, 113
        %v989 = vpop.permute.xlu0 %988
        %v990 = vsel %vm685, %v987, %v989
        %v991 = vsel %vm685, %v989, %v987
        %v992 = vmul.f32 %v692, %v990
        %v993 = vmul.f32 %v696, %v991
        %994 = vrot.lane.b32.xlu0 %v944, 112
        %v995 = vpop.permute.xlu0 %994
        %996 = vrot.lane.b32.xlu0 %v945, 112
        %v997 = vpop.permute.xlu0 %996
        %v998 = vsel %vm542, %v995, %v997
        %v999 = vsel %vm542, %v997, %v995
        %v1000 = vmul.f32 %v711, %v998
        %v1001 = vmul.f32 %v715, %v999
        %1002 = vrot.lane.b32.xlu0 %v944, 111
        %v1003 = vpop.permute.xlu0 %1002
        %1004 = vrot.lane.b32.xlu0 %v945, 111
        %v1005 = vpop.permute.xlu0 %1004
        %v1006 = vsel %vm724, %v1003, %v1005
        %v1007 = vsel %vm724, %v1005, %v1003
        %v1008 = vmul.f32 %v731, %v1006
        %v1009 = vmul.f32 %v735, %v1007
        %v1010 = vpack.c.bf16 %v960, %v952
        %v1011 = vpack.c.bf16 %v961, %v953
        %v1012 = vpack.c.bf16 %v976, %v968
        %v1013 = vpack.c.bf16 %v977, %v969
        %v1014 = vpack.c.bf16 %v984, %v944
        %v1015 = vpack.c.bf16 %v985, %v945
        %v1016 = vpack.c.bf16 %v1000, %v992
        %v1017 = vpack.c.bf16 %v1001, %v993
        %v1018 = vpack.c.bf16 %v1008, %v1008
        %v1019 = vpack.c.bf16 %v1009, %v1009
        %s1020 = scalar_lea.vmem %s4, 4
        %v1021 = vld [vmem:[%s1020] sm:$0xf]
        %v1023 = vsel %vm751, %v1021, 0
        %v1026 = vsel %vm755, %v1018, 0
        %v1029 = vsel %vm755, %v1019, 0
        %1031 = vmatprep.subr.bf16.mxu0 0
        %1032 = vmatpush1.bf16.msra.mxu0 0
        %1033 = vmatprep.subr.bf16.mxu0 0
        %1034 = vmatpush1.bf16.msra.mxu0 0
        %1035 = vmatprep.subr.bf16.mxu0 0
        %1036 = vmatpush1.bf16.msra.mxu0 0
        %1037 = vmatprep.subr.bf16.mxu0 %v1029
        %1038 = vmatpush1.bf16.msra.mxu0 %v1026
        %1039 = vmatprep.subr.bf16.mxu0 %v1017
        %1040 = vmatpush1.bf16.msra.mxu0 %v1016
        %1041 = vmatprep.subr.bf16.mxu0 %v1015
        %1042 = vmatpush1.bf16.msra.mxu0 %v1014
        %1043 = vmatprep.subr.bf16.mxu0 %v1013
        %1044 = vmatpush1.bf16.msra.mxu0 %v1012
        %1045 = vmatprep.subr.bf16.mxu0 %v1011
        %1046 = vmatpush1.bf16.msra.mxu0 %v1010
        %1047 = vmatprep.subr.bf16.mxu0 0
        %1048 = vmatpush2.bf16.msra.mxu0 0
        %1049 = vmatprep.subr.bf16.mxu0 0
        %1050 = vmatpush2.bf16.msra.mxu0 0
        %1051 = vmatprep.subr.bf16.mxu0 0
        %1052 = vmatpush2.bf16.msra.mxu0 0
        %1053 = vmatprep.subr.bf16.mxu0 0
        %1054 = vmatpush2.bf16.msra.mxu0 0
        %1055 = vmatprep.subr.bf16.mxu0 0
        %1056 = vmatpush2.bf16.msra.mxu0 0
        %1057 = vmatprep.subr.bf16.mxu0 0
        %1058 = vmatpush2.bf16.msra.mxu0 0
        %1059 = vmatprep.subr.bf16.mxu0 0
        %1060 = vmatpush2.bf16.msra.mxu0 0
        %1061 = vmatprep.subr.bf16.mxu0 0
        %1062 = vmatpush2.bf16.msra.mxu0 0
        %1063 = vmatprep.mubr.bf16.mxu0 0
        %1064 = vmatmul.mubr.bf16.gmra.mxu0 %v1023
        %v1065 = vpop.f32.mrf.mxu0
        %v1066 = vadd.f32 0.0, %v1065
        %v1067 = vpop.f32.mrf.mxu0
        %v1068 = vadd.f32 0.0, %v1067
        %v1069 = vpop.f32.mrf.mxu0
        %v1070 = vpop.f32.mrf.mxu0
        %1071 = vdwg.mxu0
        %v1072 = vadd.f32 %v803, %v1066
        %v1073 = vadd.f32 %v804, %v1068
        %1074 = vst [vmem:[%s289] sm:$0xff] %v1072
        %1075 = vst [vmem:[%s289 + $0x8] sm:$0xff] %v1073
        %s1076 = sand.u32 %s174, 1
        %s1077 = scalar_lea.sflag [#allocation3], %s1076
        %s1078 = sand.u32 %s174, 1
        %s1079 = smul.addr %s1078, 16
        %s1080 = scalar_lea.vmem [#allocation2], %s1079
        // Predicated region
        $region45: #{tpu_custom_call.1} parent=43 // pred_check
          %p1081 = pneg %p184
        $region46: #{tpu_custom_call.1} parent=43 // pred_check_branch
          %1083 = sbr.rel (%p1081) target = $region48
        $region47: #{tpu_custom_call.1} parent=43 // pred_region
          %s1085 = ssub.s32 256, 256
          %1086 = vsyncadd %s1077, %s1085
          %s1087 = smul.addr %s20, 2
          %s1088 = smul.addr %s1087, 128
          %s1089 = scalar_lea.hbm %s6, %s1088
          %s1091 = sshll.u32 %s1080, 4
          %s1092 = int_to_ptr.vmem [resolvable:$true] %s1091
          %1094 = dma.vmem_to_hbm [thread:$0]  %s1092, 256, %s1089, %s1077
        $region48: #{tpu_custom_call.1} parent=43 // pred_fallthru
          _
      $region44: #{tpu_custom_call.1} parent=5 // pred_fallthru
        _
      %p1095 = scmp.le.s32.totalorder 2, %s15
      // Predicated region
      $region49: #{tpu_custom_call.1} parent=5 // pred_check
        %p1096 = pneg %p1095
      $region50: #{tpu_custom_call.1} parent=5 // pred_check_branch
        %1098 = sbr.rel (%p1096) target = $region52
      $region51: #{tpu_custom_call.1} parent=5 // pred_region
        %s1099 = ssub.s32 %s15, 2
        // Predicated region
        $region53: #{tpu_custom_call.1} parent=51 // pred_check
          %p1100 = pneg %p190
        $region54: #{tpu_custom_call.1} parent=51 // pred_check_branch
          %1102 = sbr.rel (%p1100) target = $region56
        $region55: #{tpu_custom_call.1} parent=51 // pred_region
          %s1103 = sand.u32 %s175, 1
          %s1104 = scalar_lea.sflag [#allocation3], %s1103
          %s1105 = sand.u32 %s175, 1
          %s1106 = smul.addr %s1105, 16
          %s1107 = scalar_lea.vmem [#allocation2], %s1106
          %1108 = dma.done %s1104, 256
        $region56: #{tpu_custom_call.1} parent=51 // pred_fallthru
          _
      $region52: #{tpu_custom_call.1} parent=5 // pred_fallthru
        _
    $region6: #{tpu_custom_call.1} parent=1 // loop_footer
      %s19 = sadd.s32 1, %s15
    $region7: #{tpu_custom_call.1} parent=1 // loop_footer_branch
      %14 = sbr.rel target = $region3
    $region8: #{tpu_custom_call.1} parent=1 // loop_exit
      _
    %1109 = vsyncpa [#allocation3], 1
    %s1110 = scalar_lea.sflag [#allocation3], 1
    %1111 = vsyncpa %s1110, 1

</llo_original>
